<compile_context>
chip_gen: v7x
topology: tpu7x:2x2x1
jax: 0.10.0
libtpu: 0.0.40
codegen_flags: <defaults>
</compile_context>

<pallas_src>
import functools
import math

import jax
import jax.numpy as jnp
from jax.experimental import pallas as pl
from jax.experimental.pallas import tpu as pltpu

_LN_EPS = 1e-5


# --------------------------------------------------------------------------
# Generation-aware VMEM budget / tile targets (v5e & v6e: 128 MiB, v7x: 64 MiB).
# --------------------------------------------------------------------------
def _tpu_vmem_capacity_bytes():
    try:
        info = pltpu.get_tpu_info()
        return int(getattr(info, "vmem_capacity_bytes", 128 * 1024 * 1024))
    except Exception:
        return 128 * 1024 * 1024


_VMEM_CAP = _tpu_vmem_capacity_bytes()
_SMALL_VMEM = _VMEM_CAP < 96 * 1024 * 1024           # v7x-class part
_VMEM_LIMIT = (36 if _SMALL_VMEM else 48) * 1024 * 1024
_Q_TILE_TARGET = 256 if _SMALL_VMEM else 512
_ROW_TILE_TARGET = 256 if _SMALL_VMEM else 512
_FFN_TILE_TARGET = 1024 if _SMALL_VMEM else 2048


def _divisor_tile(n, target, multiple):
    """Largest divisor of n that is a multiple of `multiple` and <= target, else n."""
    if n <= target:
        return n
    t = (target // multiple) * multiple
    while t >= multiple:
        if n % t == 0:
            return t
        t -= multiple
    return n


def _const_spec(shape):
    """BlockSpec for a block whose index never changes (weights / biases / LN params).

    A single VMEM buffer (pl.Buffered(1)) halves the resident footprint vs. the
    default double-buffered pipeline; the block is DMA'd once and reused.
    """
    zeros = (0,) * len(shape)
    idx = lambda i, j: zeros
    try:
        return pl.BlockSpec(shape, idx, pipeline_mode=pl.Buffered(1))
    except TypeError:  # pragma: no cover - older BlockSpec signature
        return pl.BlockSpec(shape, idx)


# --------------------------------------------------------------------------
# Kernel 1: fused self-attention block, grid = (B, S // tq)
#   qi == 0 : K/V projection for the full sequence -> head-major VMEM scratch
#   each qi : Q proj (scale pre-folded) -> per-head attention into a lane-dense
#             (tq, H*dh) slab -> output projection -> + residual -> LayerNorm
# --------------------------------------------------------------------------
def _mha_block_kernel(x_ref, wq_ref, bq_ref, wk_ref, bk_ref, wv_ref, bv_ref,
                      wo_ref, bo_ref, g_ref, beta_ref, o_ref,
                      k_scr, v_scr, attn_scr,
                      *, n_heads, d_qk, d_head, q_tile, eps):
    qi = pl.program_id(1)

    # ---- once per batch element: cache K/V (bf16, head-major) for the full sequence.
    @pl.when(qi == 0)
    def _():
        x_bf = x_ref[0].astype(jnp.bfloat16)                      # (S, d_in)
        for h in range(n_heads):                                  # static unroll
            k_scr[h] = (jnp.dot(x_bf, wk_ref[h],
                                preferred_element_type=jnp.float32)
                        + bk_ref[h]).astype(jnp.bfloat16)         # (S, d_qk)
            v_scr[h] = (jnp.dot(x_bf, wv_ref[h],
                                preferred_element_type=jnp.float32)
                        + bv_ref[h]).astype(jnp.bfloat16)         # (S, d_head)

    # ---- Q projection for this query tile (1/sqrt(d_qk) folded into wq/bq at init).
    row0 = pl.multiple_of(qi * q_tile, q_tile)
    xq = x_ref[0, pl.ds(row0, q_tile), :]                         # (tq, d_in) f32
    q = jnp.dot(xq.astype(jnp.bfloat16), wq_ref[...],
                preferred_element_type=jnp.float32) + bq_ref[...]  # (tq, H*d_qk)

    # ---- per-head attention; each head's output lands in the lane-dense slab.
    for h in range(n_heads):
        # TODO(synk): this column slice is lane-misaligned when d_qk % 128 != 0.
        qh = q[:, h * d_qk:(h + 1) * d_qk].astype(jnp.bfloat16)   # (tq, d_qk)
        s = jax.lax.dot_general(qh, k_scr[h], (((1,), (1,)), ((), ())),
                                preferred_element_type=jnp.float32)  # (tq, S)
        # softmax in f32 (max-subtracted); for mask=None the denominator is >= 1,
        # so torch's nan_to_num is dead code and the approx reciprocal is safe.
        m = jnp.max(s, axis=-1, keepdims=True)
        p = jnp.exp(s - m)
        denom = jnp.sum(p, axis=-1, keepdims=True)
        w = p * pl.reciprocal(denom, approx=True)
        attn_scr[:, h * d_head:(h + 1) * d_head] = jnp.dot(
            w.astype(jnp.bfloat16), v_scr[h], preferred_element_type=jnp.float32)

    # ---- output projection (single K = H*dh matmul) + residual + LayerNorm.
    proj = jnp.dot(attn_scr[...].astype(jnp.bfloat16), wo_ref[...],
                   preferred_element_type=jnp.float32) + bo_ref[...]  # (tq, d_int)
    r = xq + proj
    mean = jnp.mean(r, axis=-1, keepdims=True)
    var = jnp.mean(jnp.square(r - mean), axis=-1, keepdims=True)
    y = (r - mean) * jax.lax.rsqrt(var + eps) * g_ref[...] + beta_ref[...]
    o_ref[0] = y.astype(o_ref.dtype)                              # bf16 intermediate


# --------------------------------------------------------------------------
# Kernel 2: fused FFN block, grid = (ceil(M/tm), d_ffn // tf)
#   per f-chunk: h = relu(x @ w1[:, f] + b1[f]); acc += h @ w2[f, :]
#   last chunk : + b2, + residual, LayerNorm
# --------------------------------------------------------------------------
def _ffn_block_kernel(x_ref, w1_ref, b1_ref, w2_ref, b2_ref, g_ref, beta_ref,
                      o_ref, acc_ref, *, eps):
    f = pl.program_id(1)
    x_bf = x_ref[...]                                             # (tm, d_int) bf16
    h = jnp.dot(x_bf, w1_ref[...], preferred_element_type=jnp.float32) + b1_ref[...]
    h = jnp.maximum(h, 0.0)                                       # ReLU (dropout = identity)
    part = jnp.dot(h.astype(jnp.bfloat16), w2_ref[...],
                   preferred_element_type=jnp.float32)            # (tm, d_out)

    @pl.when(f == 0)
    def _():
        acc_ref[...] = part

    @pl.when(f > 0)
    def _():
        acc_ref[...] += part

    @pl.when(f == pl.num_programs(1) - 1)
    def _():
        r = x_bf.astype(jnp.float32) + acc_ref[...] + b2_ref[...]  # residual
        mean = jnp.mean(r, axis=-1, keepdims=True)
        var = jnp.mean(jnp.square(r - mean), axis=-1, keepdims=True)
        o_ref[...] = (r - mean) * jax.lax.rsqrt(var + eps) * g_ref[...] + beta_ref[...]


# --------------------------------------------------------------------------
# Module wrapper
# --------------------------------------------------------------------------
class StandardEncoderLayerPallas:
    def __init__(self, d_input, d_intermediate, d_output, d_ffn, dropout_rate,
                 n_heads, key=None):
        self.n_heads = int(n_heads)
        self.d_qk = int(d_intermediate // n_heads)
        self.d_head = int(d_intermediate // n_heads)
        self.d_input = int(d_input)
        self.d_int = int(d_intermediate)
        self.d_out = int(d_output)
        self.d_ffn = int(d_ffn if d_ffn else d_intermediate * 4)
        self.inv_scale = 1.0 / math.sqrt(self.d_qk)
        self.eps = _LN_EPS
        self.dropout_rate = dropout_rate  # identity at inference

        # Residual adds in the original module require these equalities.
        assert d_input == d_intermediate == d_output, \
            "StandardEncoderLayer residuals require d_input == d_intermediate == d_output"

        if key is None:
            key = jax.random.PRNGKey(0)
        ks = jax.random.split(key, 12)

        def init_linear(kw, kb, d_in_, d_out_):
            # nn.Linear default init: U(-1/sqrt(fan_in), 1/sqrt(fan_in))
            bound = 1.0 / math.sqrt(d_in_)
            w = jax.random.uniform(kw, (d_in_, d_out_), jnp.float32, -bound, bound)
            b = jax.random.uniform(kb, (1, d_out_), jnp.float32, -bound, bound)
            return w, b

        H, dqk, dh = self.n_heads, self.d_qk, self.d_head
        wq, bq = init_linear(ks[0], ks[1], d_input, H * dqk)
        wk, bk = init_linear(ks[2], ks[3], d_input, H * dqk)
        wv, bv = init_linear(ks[4], ks[5], d_input, H * dh)

        # 1/sqrt(d_qk) folded into the query projection (weights + bias).
        self.wq = (wq * self.inv_scale).astype(jnp.bfloat16)       # (d_in, H*dqk)
        self.bq = bq * self.inv_scale                              # (1, H*dqk) f32

        # K/V projection weights pre-split per head (leading head axis) so the
        # kernel indexes whole aligned 2-D slabs instead of misaligned columns.
        self.wk = jnp.transpose(wk.reshape(d_input, H, dqk), (1, 0, 2)).astype(jnp.bfloat16)
        self.bk = bk.reshape(H, 1, dqk)                            # f32
        self.wv = jnp.transpose(wv.reshape(d_input, H, dh), (1, 0, 2)).astype(jnp.bfloat16)
        self.bv = bv.reshape(H, 1, dh)                             # f32

        wo, self.bo = init_linear(ks[6], ks[7], H * dh, self.d_int)
        self.wo = wo.astype(jnp.bfloat16)

        w1, self.b1 = init_linear(ks[8], ks[9], self.d_int, self.d_ffn)
        w2, self.b2 = init_linear(ks[10], ks[11], self.d_ffn, self.d_out)
        self.w1 = w1.astype(jnp.bfloat16)
        self.w2 = w2.astype(jnp.bfloat16)

        # LayerNorm params (gamma=1, beta=0).
        self.g1 = jnp.ones((1, self.d_int), jnp.float32)
        self.beta1 = jnp.zeros((1, self.d_int), jnp.float32)
        self.g2 = jnp.ones((1, self.d_out), jnp.float32)
        self.beta2 = jnp.zeros((1, self.d_out), jnp.float32)

    def __call__(self, x, mask=None):
        assert mask is None  # TODO(synk): masking not implemented
        B, S, d_in = x.shape
        H, dqk, dh = self.n_heads, self.d_qk, self.d_head
        d_int, d_out, d_ffn = self.d_int, self.d_out, self.d_ffn

        cp = pltpu.CompilerParams(dimension_semantics=("parallel", "arbitrary"),
                                  vmem_limit_bytes=_VMEM_LIMIT)

        # ---- fused self-attention block, grid over (batch, query tiles) ----
        tq = _divisor_tile(S, _Q_TILE_TARGET, 8)   # divisor of S (in-kernel pl.ds slicing)
        nq = S // tq

        mha_flops = (2 * B * S * d_in * (2 * H * dqk + H * dh)       # Q/K/V projections
                     + 2 * B * H * S * S * (dqk + dh)                # scores + attn@v
                     + 2 * B * S * (H * dh) * d_int)                 # output projection
        mha_bytes = (B * S * d_in * 4 + B * S * d_int * 2
                     + 2 * (2 * d_in * H * dqk + d_in * H * dh + H * dh * d_int))
        mha_cost = pl.CostEstimate(flops=int(mha_flops),
                                   transcendentals=int(B * H * S * S),
                                   bytes_accessed=int(mha_bytes))

        mha = functools.partial(_mha_block_kernel, n_heads=H, d_qk=dqk, d_head=dh,
                                q_tile=tq, eps=self.eps)
        y1 = pl.pallas_call(
            mha,
            out_shape=jax.ShapeDtypeStruct((B, S, d_int), jnp.bfloat16),
            grid=(B, nq),
            in_specs=[
                pl.BlockSpec((1, S, d_in), lambda b, qi: (b, 0, 0)),  # full seq per batch
                _const_spec((d_in, H * dqk)),     # wq (scale folded)
                _const_spec((1, H * dqk)),        # bq
                _const_spec((H, d_in, dqk)),      # wk (head-major)
                _const_spec((H, 1, dqk)),         # bk
                _const_spec((H, d_in, dh)),       # wv (head-major)
                _const_spec((H, 1, dh)),          # bv
                _const_spec((H * dh, d_int)),     # wo
                _const_spec((1, d_int)),          # bo
                _const_spec((1, d_int)),          # gamma1
                _const_spec((1, d_int)),          # beta1
            ],
            out_specs=pl.BlockSpec((1, tq, d_int), lambda b, qi: (b, qi, 0)),
            scratch_shapes=[
                pltpu.VMEM((H, S, dqk), jnp.bfloat16),   # cached K (head-major)
                pltpu.VMEM((H, S, dh), jnp.bfloat16),    # cached V (head-major)
                pltpu.VMEM((tq, H * dh), jnp.float32),   # lane-dense head-concat slab
            ],
            compiler_params=cp,
            cost_estimate=mha_cost,
        )(x, self.wq, self.bq, self.wk, self.bk, self.wv, self.bv,
          self.wo, self.bo, self.g1, self.beta1)

        # ---- fused FFN block, grid over (row tiles, d_ffn chunks) ----
        M = B * S
        tm = M if M <= _ROW_TILE_TARGET else (_ROW_TILE_TARGET // 8) * 8
        nm = pl.cdiv(M, tm)                        # partial tail block handled by Pallas
        tf = _divisor_tile(d_ffn, _FFN_TILE_TARGET, 128)
        nf = d_ffn // tf

        ffn_flops = 2 * M * d_int * d_ffn + 2 * M * d_ffn * d_out
        ffn_bytes = (M * d_int * 2 + M * d_out * 4
                     + 2 * (d_int * d_ffn + d_ffn * d_out))
        ffn_cost = pl.CostEstimate(flops=int(ffn_flops), transcendentals=0,
                                   bytes_accessed=int(ffn_bytes))

        ffn = functools.partial(_ffn_block_kernel, eps=self.eps)
        y2 = pl.pallas_call(
            ffn,
            out_shape=jax.ShapeDtypeStruct((M, d_out), jnp.float32),
            grid=(nm, nf),
            in_specs=[
                pl.BlockSpec((tm, d_int), lambda i, f: (i, 0)),   # y1 tile (bf16)
                pl.BlockSpec((d_int, tf), lambda i, f: (0, f)),   # w1 column chunk
                pl.BlockSpec((1, tf), lambda i, f: (0, f)),       # b1 chunk
                pl.BlockSpec((tf, d_out), lambda i, f: (f, 0)),   # w2 row chunk
                _const_spec((1, d_out)),                          # b2
                _const_spec((1, d_out)),                          # gamma2
                _const_spec((1, d_out)),                          # beta2
            ],
            out_specs=pl.BlockSpec((tm, d_out), lambda i, f: (i, 0)),
            scratch_shapes=[pltpu.VMEM((tm, d_out), jnp.float32)],  # f32 accumulator
            compiler_params=cp,
            cost_estimate=ffn_cost,
        )(y1.reshape(M, d_int), self.w1, self.b1, self.w2, self.b2,
          self.g2, self.beta2)

        return y2.reshape(B, S, d_out)


# --------------------------------------------------------------------------
# Plain-JAX reference (f32 math, same stored weights) for a sanity check.
# --------------------------------------------------------------------------
def _reference_forward(layer, x):
    B, S, _ = x.shape
    H, dqk, dh = layer.n_heads, layer.d_qk, layer.d_head
    x2 = x.reshape(B * S, -1)

    q = (x2 @ layer.wq.astype(jnp.float32) + layer.bq)          # scale already folded
    q = q.reshape(B, S, H, dqk).transpose(0, 2, 1, 3)
    k = jnp.einsum("bse,hed->bhsd", x, layer.wk.astype(jnp.float32)) + layer.bk[None]
    v = jnp.einsum("bse,hed->bhsd", x, layer.wv.astype(jnp.float32)) + layer.bv[None]

    s = jnp.einsum("bhqd,bhkd->bhqk", q, k)
    p = jax.nn.softmax(s, axis=-1)
    o = jnp.einsum("bhqk,bhkd->bhqd", p, v)
    o = o.transpose(0, 2, 1, 3).reshape(B * S, H * dh)

    def ln(r, g, b):
        mu = jnp.mean(r, axis=-1, keepdims=True)
        var = jnp.mean(jnp.square(r - mu), axis=-1, keepdims=True)
        return (r - mu) / jnp.sqrt(var + layer.eps) * g + b

    y1 = ln(x2 + (o @ layer.wo.astype(jnp.float32) + layer.bo), layer.g1, layer.beta1)
    hid = jnp.maximum(y1 @ layer.w1.astype(jnp.float32) + layer.b1, 0.0)
    y2 = ln(y1 + (hid @ layer.w2.astype(jnp.float32) + layer.b2), layer.g2, layer.beta2)
    return y2.reshape(B, S, -1)


if __name__ == "__main__":
    key = jax.random.PRNGKey(0)
    k_x, k_params = jax.random.split(key)

    # Small shapes consistent with the module (residuals require equal widths).
    B, S = 2, 8
    d_input = d_intermediate = d_output = 32
    d_ffn = 64
    n_heads = 4
    dropout_rate = 0.1

    layer = StandardEncoderLayerPallas(
        d_input, d_intermediate, d_output, d_ffn, dropout_rate, n_heads, key=k_params
    )

    x = jax.random.normal(k_x, (B, S, d_input), jnp.float32)

    out = layer(x)
    jax.block_until_ready(out)

    assert out.shape == (B, S, d_output)
    assert bool(jnp.all(jnp.isfinite(out)))

    # Loose tolerance: kernel uses bf16 MXU inputs, a bf16 y1 intermediate and an
    # approximate reciprocal in the softmax.
    ref = _reference_forward(layer, x)
    assert bool(jnp.allclose(out, ref, atol=0.1, rtol=0.1))

    print("KERNEL_OK")
</pallas_src>

<mosaic_0001>
module attributes {stable_mosaic.version = 11 : i64} {
  func.func @_mha_block_kernel(%arg0: i32, %arg1: i32, %arg2: memref<1x8x32xf32, #tpu.memory_space<vmem>>, %arg3: memref<32x32xbf16, #tpu.memory_space<vmem>>, %arg4: memref<1x32xf32, #tpu.memory_space<vmem>>, %arg5: memref<4x32x8xbf16, #tpu.memory_space<vmem>>, %arg6: memref<4x1x8xf32, #tpu.memory_space<vmem>>, %arg7: memref<4x32x8xbf16, #tpu.memory_space<vmem>>, %arg8: memref<4x1x8xf32, #tpu.memory_space<vmem>>, %arg9: memref<32x32xbf16, #tpu.memory_space<vmem>>, %arg10: memref<1x32xf32, #tpu.memory_space<vmem>>, %arg11: memref<1x32xf32, #tpu.memory_space<vmem>>, %arg12: memref<1x32xf32, #tpu.memory_space<vmem>>, %arg13: memref<1x8x32xbf16, #tpu.memory_space<vmem>>, %arg14: memref<4x8x8xbf16, #tpu.memory_space<vmem>>, %arg15: memref<4x8x8xbf16, #tpu.memory_space<vmem>>, %arg16: memref<8x32xf32, #tpu.memory_space<vmem>>) attributes {dimension_semantics = [#tpu.dimension_semantics<parallel>, #tpu.dimension_semantics<arbitrary>], iteration_bounds = array<i64: 2, 1>, scalar_prefetch = 0 : i64, scratch_operands = 3 : i64, tpu.core_type = #tpu.core_type<tc>, window_params = [{transform_indices = @transform_0, window_bounds = array<i64: 1, 8, 32>}, {pipeline_mode = #tpu.pipeline_mode<synchronous>, transform_indices = @transform_1, window_bounds = array<i64: 32, 32>}, {pipeline_mode = #tpu.pipeline_mode<synchronous>, transform_indices = @transform_2, window_bounds = array<i64: 1, 32>}, {pipeline_mode = #tpu.pipeline_mode<synchronous>, transform_indices = @transform_3, window_bounds = array<i64: 4, 32, 8>}, {pipeline_mode = #tpu.pipeline_mode<synchronous>, transform_indices = @transform_4, window_bounds = array<i64: 4, 1, 8>}, {pipeline_mode = #tpu.pipeline_mode<synchronous>, transform_indices = @transform_5, window_bounds = array<i64: 4, 32, 8>}, {pipeline_mode = #tpu.pipeline_mode<synchronous>, transform_indices = @transform_6, window_bounds = array<i64: 4, 1, 8>}, {pipeline_mode = #tpu.pipeline_mode<synchronous>, transform_indices = @transform_7, window_bounds = array<i64: 32, 32>}, {pipeline_mode = #tpu.pipeline_mode<synchronous>, transform_indices = @transform_8, window_bounds = array<i64: 1, 32>}, {pipeline_mode = #tpu.pipeline_mode<synchronous>, transform_indices = @transform_9, window_bounds = array<i64: 1, 32>}, {pipeline_mode = #tpu.pipeline_mode<synchronous>, transform_indices = @transform_10, window_bounds = array<i64: 1, 32>}, {transform_indices = @transform_11, window_bounds = array<i64: 1, 8, 32>}]} {
    %c0_i32 = arith.constant 0 : i32
    %0 = arith.cmpi eq, %arg1, %c0_i32 : i32
    %1 = arith.extui %0 : i1 to i32
    %c0_i32_0 = arith.constant 0 : i32
    %2 = arith.cmpi ne, %1, %c0_i32_0 : i32
    scf.if %2 {
      %c0_67 = arith.constant 0 : index
      %c0_68 = arith.constant 0 : index
      %c0_69 = arith.constant 0 : index
      %130 = vector.load %arg2[%c0_67, %c0_68, %c0_69] : memref<1x8x32xf32, #tpu.memory_space<vmem>>, vector<1x8x32xf32>
      %131 = vector.shape_cast %130 : vector<1x8x32xf32> to vector<8x32xf32>
      %132 = arith.truncf %131 : vector<8x32xf32> to vector<8x32xbf16>
      %c0_70 = arith.constant 0 : index
      %c0_71 = arith.constant 0 : index
      %c0_72 = arith.constant 0 : index
      %133 = vector.load %arg5[%c0_70, %c0_71, %c0_72] : memref<4x32x8xbf16, #tpu.memory_space<vmem>>, vector<1x32x8xbf16>
      %134 = vector.shape_cast %133 : vector<1x32x8xbf16> to vector<32x8xbf16>
      %cst_73 = arith.constant dense<0.000000e+00> : vector<8x8xf32>
      %135 = tpu.matmul %132, %134, %cst_73 {dimension_numbers = #tpu.dot_dimension_numbers<[1], [0], [0], [1], [0, 0, 1, 1], [], []>} : vector<8x32xbf16>, vector<32x8xbf16>, vector<8x8xf32> -> vector<8x8xf32>
      %c0_74 = arith.constant 0 : index
      %c0_75 = arith.constant 0 : index
      %c0_76 = arith.constant 0 : index
      %136 = vector.load %arg6[%c0_74, %c0_75, %c0_76] : memref<4x1x8xf32, #tpu.memory_space<vmem>>, vector<1x1x8xf32>
      %137 = vector.shape_cast %136 : vector<1x1x8xf32> to vector<1x8xf32>
      %138 = vector.broadcast %137 : vector<1x8xf32> to vector<8x8xf32>
      %139 = arith.addf %135, %138 : vector<8x8xf32>
      %140 = arith.truncf %139 : vector<8x8xf32> to vector<8x8xbf16>
      %c0_77 = arith.constant 0 : index
      %c0_78 = arith.constant 0 : index
      %c0_79 = arith.constant 0 : index
      %141 = vector.load %arg14[%c0_77, %c0_78, %c0_79] : memref<4x8x8xbf16, #tpu.memory_space<vmem>>, vector<1x8x8xbf16>
      %142 = vector.shape_cast %141 : vector<1x8x8xbf16> to vector<8x8xbf16>
      %143 = vector.shape_cast %140 : vector<8x8xbf16> to vector<1x8x8xbf16>
      tpu.vector_store %arg14[%c0_77, %c0_78, %c0_79], %143 {strides = array<i32>} : memref<4x8x8xbf16, #tpu.memory_space<vmem>>, vector<1x8x8xbf16>,
      %c0_80 = arith.constant 0 : index
      %c0_81 = arith.constant 0 : index
      %c0_82 = arith.constant 0 : index
      %144 = vector.load %arg7[%c0_80, %c0_81, %c0_82] : memref<4x32x8xbf16, #tpu.memory_space<vmem>>, vector<1x32x8xbf16>
      %145 = vector.shape_cast %144 : vector<1x32x8xbf16> to vector<32x8xbf16>
      %cst_83 = arith.constant dense<0.000000e+00> : vector<8x8xf32>
      %146 = tpu.matmul %132, %145, %cst_83 {dimension_numbers = #tpu.dot_dimension_numbers<[1], [0], [0], [1], [0, 0, 1, 1], [], []>} : vector<8x32xbf16>, vector<32x8xbf16>, vector<8x8xf32> -> vector<8x8xf32>
      %c0_84 = arith.constant 0 : index
      %c0_85 = arith.constant 0 : index
      %c0_86 = arith.constant 0 : index
      %147 = vector.load %arg8[%c0_84, %c0_85, %c0_86] : memref<4x1x8xf32, #tpu.memory_space<vmem>>, vector<1x1x8xf32>
      %148 = vector.shape_cast %147 : vector<1x1x8xf32> to vector<1x8xf32>
      %149 = vector.broadcast %148 : vector<1x8xf32> to vector<8x8xf32>
      %150 = arith.addf %146, %149 : vector<8x8xf32>
      %151 = arith.truncf %150 : vector<8x8xf32> to vector<8x8xbf16>
      %c0_87 = arith.constant 0 : index
      %c0_88 = arith.constant 0 : index
      %c0_89 = arith.constant 0 : index
      %152 = vector.load %arg15[%c0_87, %c0_88, %c0_89] : memref<4x8x8xbf16, #tpu.memory_space<vmem>>, vector<1x8x8xbf16>
      %153 = vector.shape_cast %152 : vector<1x8x8xbf16> to vector<8x8xbf16>
      %154 = vector.shape_cast %151 : vector<8x8xbf16> to vector<1x8x8xbf16>
      tpu.vector_store %arg15[%c0_87, %c0_88, %c0_89], %154 {strides = array<i32>} : memref<4x8x8xbf16, #tpu.memory_space<vmem>>, vector<1x8x8xbf16>,
      %c1_90 = arith.constant 1 : index
      %c0_91 = arith.constant 0 : index
      %c0_92 = arith.constant 0 : index
      %155 = vector.load %arg5[%c1_90, %c0_91, %c0_92] : memref<4x32x8xbf16, #tpu.memory_space<vmem>>, vector<1x32x8xbf16>
      %156 = vector.shape_cast %155 : vector<1x32x8xbf16> to vector<32x8xbf16>
      %cst_93 = arith.constant dense<0.000000e+00> : vector<8x8xf32>
      %157 = tpu.matmul %132, %156, %cst_93 {dimension_numbers = #tpu.dot_dimension_numbers<[1], [0], [0], [1], [0, 0, 1, 1], [], []>} : vector<8x32xbf16>, vector<32x8xbf16>, vector<8x8xf32> -> vector<8x8xf32>
      %c1_94 = arith.constant 1 : index
      %c0_95 = arith.constant 0 : index
      %c0_96 = arith.constant 0 : index
      %158 = vector.load %arg6[%c1_94, %c0_95, %c0_96] : memref<4x1x8xf32, #tpu.memory_space<vmem>>, vector<1x1x8xf32>
      %159 = vector.shape_cast %158 : vector<1x1x8xf32> to vector<1x8xf32>
      %160 = vector.broadcast %159 : vector<1x8xf32> to vector<8x8xf32>
      %161 = arith.addf %157, %160 : vector<8x8xf32>
      %162 = arith.truncf %161 : vector<8x8xf32> to vector<8x8xbf16>
      %c1_97 = arith.constant 1 : index
      %c0_98 = arith.constant 0 : index
      %c0_99 = arith.constant 0 : index
      %163 = vector.load %arg14[%c1_97, %c0_98, %c0_99] : memref<4x8x8xbf16, #tpu.memory_space<vmem>>, vector<1x8x8xbf16>
      %164 = vector.shape_cast %163 : vector<1x8x8xbf16> to vector<8x8xbf16>
      %165 = vector.shape_cast %162 : vector<8x8xbf16> to vector<1x8x8xbf16>
      tpu.vector_store %arg14[%c1_97, %c0_98, %c0_99], %165 {strides = array<i32>} : memref<4x8x8xbf16, #tpu.memory_space<vmem>>, vector<1x8x8xbf16>,
      %c1_100 = arith.constant 1 : index
      %c0_101 = arith.constant 0 : index
      %c0_102 = arith.constant 0 : index
      %166 = vector.load %arg7[%c1_100, %c0_101, %c0_102] : memref<4x32x8xbf16, #tpu.memory_space<vmem>>, vector<1x32x8xbf16>
      %167 = vector.shape_cast %166 : vector<1x32x8xbf16> to vector<32x8xbf16>
      %cst_103 = arith.constant dense<0.000000e+00> : vector<8x8xf32>
      %168 = tpu.matmul %132, %167, %cst_103 {dimension_numbers = #tpu.dot_dimension_numbers<[1], [0], [0], [1], [0, 0, 1, 1], [], []>} : vector<8x32xbf16>, vector<32x8xbf16>, vector<8x8xf32> -> vector<8x8xf32>
      %c1_104 = arith.constant 1 : index
      %c0_105 = arith.constant 0 : index
      %c0_106 = arith.constant 0 : index
      %169 = vector.load %arg8[%c1_104, %c0_105, %c0_106] : memref<4x1x8xf32, #tpu.memory_space<vmem>>, vector<1x1x8xf32>
      %170 = vector.shape_cast %169 : vector<1x1x8xf32> to vector<1x8xf32>
      %171 = vector.broadcast %170 : vector<1x8xf32> to vector<8x8xf32>
      %172 = arith.addf %168, %171 : vector<8x8xf32>
      %173 = arith.truncf %172 : vector<8x8xf32> to vector<8x8xbf16>
      %c1_107 = arith.constant 1 : index
      %c0_108 = arith.constant 0 : index
      %c0_109 = arith.constant 0 : index
      %174 = vector.load %arg15[%c1_107, %c0_108, %c0_109] : memref<4x8x8xbf16, #tpu.memory_space<vmem>>, vector<1x8x8xbf16>
      %175 = vector.shape_cast %174 : vector<1x8x8xbf16> to vector<8x8xbf16>
      %176 = vector.shape_cast %173 : vector<8x8xbf16> to vector<1x8x8xbf16>
      tpu.vector_store %arg15[%c1_107, %c0_108, %c0_109], %176 {strides = array<i32>} : memref<4x8x8xbf16, #tpu.memory_space<vmem>>, vector<1x8x8xbf16>,
      %c2_110 = arith.constant 2 : index
      %c0_111 = arith.constant 0 : index
      %c0_112 = arith.constant 0 : index
      %177 = vector.load %arg5[%c2_110, %c0_111, %c0_112] : memref<4x32x8xbf16, #tpu.memory_space<vmem>>, vector<1x32x8xbf16>
      %178 = vector.shape_cast %177 : vector<1x32x8xbf16> to vector<32x8xbf16>
      %cst_113 = arith.constant dense<0.000000e+00> : vector<8x8xf32>
      %179 = tpu.matmul %132, %178, %cst_113 {dimension_numbers = #tpu.dot_dimension_numbers<[1], [0], [0], [1], [0, 0, 1, 1], [], []>} : vector<8x32xbf16>, vector<32x8xbf16>, vector<8x8xf32> -> vector<8x8xf32>
      %c2_114 = arith.constant 2 : index
      %c0_115 = arith.constant 0 : index
      %c0_116 = arith.constant 0 : index
      %180 = vector.load %arg6[%c2_114, %c0_115, %c0_116] : memref<4x1x8xf32, #tpu.memory_space<vmem>>, vector<1x1x8xf32>
      %181 = vector.shape_cast %180 : vector<1x1x8xf32> to vector<1x8xf32>
      %182 = vector.broadcast %181 : vector<1x8xf32> to vector<8x8xf32>
      %183 = arith.addf %179, %182 : vector<8x8xf32>
      %184 = arith.truncf %183 : vector<8x8xf32> to vector<8x8xbf16>
      %c2_117 = arith.constant 2 : index
      %c0_118 = arith.constant 0 : index
      %c0_119 = arith.constant 0 : index
      %185 = vector.load %arg14[%c2_117, %c0_118, %c0_119] : memref<4x8x8xbf16, #tpu.memory_space<vmem>>, vector<1x8x8xbf16>
      %186 = vector.shape_cast %185 : vector<1x8x8xbf16> to vector<8x8xbf16>
      %187 = vector.shape_cast %184 : vector<8x8xbf16> to vector<1x8x8xbf16>
      tpu.vector_store %arg14[%c2_117, %c0_118, %c0_119], %187 {strides = array<i32>} : memref<4x8x8xbf16, #tpu.memory_space<vmem>>, vector<1x8x8xbf16>,
      %c2_120 = arith.constant 2 : index
      %c0_121 = arith.constant 0 : index
      %c0_122 = arith.constant 0 : index
      %188 = vector.load %arg7[%c2_120, %c0_121, %c0_122] : memref<4x32x8xbf16, #tpu.memory_space<vmem>>, vector<1x32x8xbf16>
      %189 = vector.shape_cast %188 : vector<1x32x8xbf16> to vector<32x8xbf16>
      %cst_123 = arith.constant dense<0.000000e+00> : vector<8x8xf32>
      %190 = tpu.matmul %132, %189, %cst_123 {dimension_numbers = #tpu.dot_dimension_numbers<[1], [0], [0], [1], [0, 0, 1, 1], [], []>} : vector<8x32xbf16>, vector<32x8xbf16>, vector<8x8xf32> -> vector<8x8xf32>
      %c2_124 = arith.constant 2 : index
      %c0_125 = arith.constant 0 : index
      %c0_126 = arith.constant 0 : index
      %191 = vector.load %arg8[%c2_124, %c0_125, %c0_126] : memref<4x1x8xf32, #tpu.memory_space<vmem>>, vector<1x1x8xf32>
      %192 = vector.shape_cast %191 : vector<1x1x8xf32> to vector<1x8xf32>
      %193 = vector.broadcast %192 : vector<1x8xf32> to vector<8x8xf32>
      %194 = arith.addf %190, %193 : vector<8x8xf32>
      %195 = arith.truncf %194 : vector<8x8xf32> to vector<8x8xbf16>
      %c2_127 = arith.constant 2 : index
      %c0_128 = arith.constant 0 : index
      %c0_129 = arith.constant 0 : index
      %196 = vector.load %arg15[%c2_127, %c0_128, %c0_129] : memref<4x8x8xbf16, #tpu.memory_space<vmem>>, vector<1x8x8xbf16>
      %197 = vector.shape_cast %196 : vector<1x8x8xbf16> to vector<8x8xbf16>
      %198 = vector.shape_cast %195 : vector<8x8xbf16> to vector<1x8x8xbf16>
      tpu.vector_store %arg15[%c2_127, %c0_128, %c0_129], %198 {strides = array<i32>} : memref<4x8x8xbf16, #tpu.memory_space<vmem>>, vector<1x8x8xbf16>,
      %c3_130 = arith.constant 3 : index
      %c0_131 = arith.constant 0 : index
      %c0_132 = arith.constant 0 : index
      %199 = vector.load %arg5[%c3_130, %c0_131, %c0_132] : memref<4x32x8xbf16, #tpu.memory_space<vmem>>, vector<1x32x8xbf16>
      %200 = vector.shape_cast %199 : vector<1x32x8xbf16> to vector<32x8xbf16>
      %cst_133 = arith.constant dense<0.000000e+00> : vector<8x8xf32>
      %201 = tpu.matmul %132, %200, %cst_133 {dimension_numbers = #tpu.dot_dimension_numbers<[1], [0], [0], [1], [0, 0, 1, 1], [], []>} : vector<8x32xbf16>, vector<32x8xbf16>, vector<8x8xf32> -> vector<8x8xf32>
      %c3_134 = arith.constant 3 : index
      %c0_135 = arith.constant 0 : index
      %c0_136 = arith.constant 0 : index
      %202 = vector.load %arg6[%c3_134, %c0_135, %c0_136] : memref<4x1x8xf32, #tpu.memory_space<vmem>>, vector<1x1x8xf32>
      %203 = vector.shape_cast %202 : vector<1x1x8xf32> to vector<1x8xf32>
      %204 = vector.broadcast %203 : vector<1x8xf32> to vector<8x8xf32>
      %205 = arith.addf %201, %204 : vector<8x8xf32>
      %206 = arith.truncf %205 : vector<8x8xf32> to vector<8x8xbf16>
      %c3_137 = arith.constant 3 : index
      %c0_138 = arith.constant 0 : index
      %c0_139 = arith.constant 0 : index
      %207 = vector.load %arg14[%c3_137, %c0_138, %c0_139] : memref<4x8x8xbf16, #tpu.memory_space<vmem>>, vector<1x8x8xbf16>
      %208 = vector.shape_cast %207 : vector<1x8x8xbf16> to vector<8x8xbf16>
      %209 = vector.shape_cast %206 : vector<8x8xbf16> to vector<1x8x8xbf16>
      tpu.vector_store %arg14[%c3_137, %c0_138, %c0_139], %209 {strides = array<i32>} : memref<4x8x8xbf16, #tpu.memory_space<vmem>>, vector<1x8x8xbf16>,
      %c3_140 = arith.constant 3 : index
      %c0_141 = arith.constant 0 : index
      %c0_142 = arith.constant 0 : index
      %210 = vector.load %arg7[%c3_140, %c0_141, %c0_142] : memref<4x32x8xbf16, #tpu.memory_space<vmem>>, vector<1x32x8xbf16>
      %211 = vector.shape_cast %210 : vector<1x32x8xbf16> to vector<32x8xbf16>
      %cst_143 = arith.constant dense<0.000000e+00> : vector<8x8xf32>
      %212 = tpu.matmul %132, %211, %cst_143 {dimension_numbers = #tpu.dot_dimension_numbers<[1], [0], [0], [1], [0, 0, 1, 1], [], []>} : vector<8x32xbf16>, vector<32x8xbf16>, vector<8x8xf32> -> vector<8x8xf32>
      %c3_144 = arith.constant 3 : index
      %c0_145 = arith.constant 0 : index
      %c0_146 = arith.constant 0 : index
      %213 = vector.load %arg8[%c3_144, %c0_145, %c0_146] : memref<4x1x8xf32, #tpu.memory_space<vmem>>, vector<1x1x8xf32>
      %214 = vector.shape_cast %213 : vector<1x1x8xf32> to vector<1x8xf32>
      %215 = vector.broadcast %214 : vector<1x8xf32> to vector<8x8xf32>
      %216 = arith.addf %212, %215 : vector<8x8xf32>
      %217 = arith.truncf %216 : vector<8x8xf32> to vector<8x8xbf16>
      %c3_147 = arith.constant 3 : index
      %c0_148 = arith.constant 0 : index
      %c0_149 = arith.constant 0 : index
      %218 = vector.load %arg15[%c3_147, %c0_148, %c0_149] : memref<4x8x8xbf16, #tpu.memory_space<vmem>>, vector<1x8x8xbf16>
      %219 = vector.shape_cast %218 : vector<1x8x8xbf16> to vector<8x8xbf16>
      %220 = vector.shape_cast %217 : vector<8x8xbf16> to vector<1x8x8xbf16>
      tpu.vector_store %arg15[%c3_147, %c0_148, %c0_149], %220 {strides = array<i32>} : memref<4x8x8xbf16, #tpu.memory_space<vmem>>, vector<1x8x8xbf16>,
    } else {
    }
    %c8_i32 = arith.constant 8 : i32
    %3 = arith.muli %arg1, %c8_i32 : i32
    %4 = tpu.assume_multiple %3, 8 : i32
    %c0 = arith.constant 0 : index
    %5 = arith.index_cast %4 : i32 to index
    %c0_1 = arith.constant 0 : index
    %6 = vector.load %arg2[%c0, %5, %c0_1] : memref<1x8x32xf32, #tpu.memory_space<vmem>>, vector<1x8x32xf32>
    %7 = vector.shape_cast %6 : vector<1x8x32xf32> to vector<8x32xf32>
    %8 = arith.truncf %7 : vector<8x32xf32> to vector<8x32xbf16>
    %c0_2 = arith.constant 0 : index
    %c0_3 = arith.constant 0 : index
    %9 = vector.load %arg3[%c0_2, %c0_3] : memref<32x32xbf16, #tpu.memory_space<vmem>>, vector<32x32xbf16>
    %cst = arith.constant dense<0.000000e+00> : vector<8x32xf32>
    %10 = tpu.matmul %8, %9, %cst {dimension_numbers = #tpu.dot_dimension_numbers<[1], [0], [0], [1], [0, 0, 1, 1], [], []>} : vector<8x32xbf16>, vector<32x32xbf16>, vector<8x32xf32> -> vector<8x32xf32>
    %c0_4 = arith.constant 0 : index
    %c0_5 = arith.constant 0 : index
    %11 = vector.load %arg4[%c0_4, %c0_5] : memref<1x32xf32, #tpu.memory_space<vmem>>, vector<1x32xf32>
    %12 = vector.broadcast %11 : vector<1x32xf32> to vector<8x32xf32>
    %13 = arith.addf %10, %12 : vector<8x32xf32>
    %14 = vector.extract_strided_slice %13 {offsets = [0, 0], sizes = [8, 8], strides = [1, 1]} : vector<8x32xf32> to vector<8x8xf32>
    %15 = arith.truncf %14 : vector<8x8xf32> to vector<8x8xbf16>
    %c0_6 = arith.constant 0 : index
    %c0_7 = arith.constant 0 : index
    %c0_8 = arith.constant 0 : index
    %16 = vector.load %arg14[%c0_6, %c0_7, %c0_8] : memref<4x8x8xbf16, #tpu.memory_space<vmem>>, vector<1x8x8xbf16>
    %17 = vector.shape_cast %16 : vector<1x8x8xbf16> to vector<8x8xbf16>
    %cst_9 = arith.constant dense<0.000000e+00> : vector<8x8xf32>
    %18 = tpu.matmul %15, %17, %cst_9 {dimension_numbers = #tpu.dot_dimension_numbers<[1], [1], [0], [0], [0, 0, 1, 0], [], []>} : vector<8x8xbf16>, vector<8x8xbf16>, vector<8x8xf32> -> vector<8x8xf32>
    %cst_10 = arith.constant dense<0xFF800000> : vector<8xf32>
    %19 = vector.multi_reduction <maximumf>, %18, %cst_10 [1] : vector<8x8xf32> to vector<8xf32>
    %20 = vector.shape_cast %19 : vector<8xf32> to vector<8x1xf32>
    %21 = vector.broadcast %20 : vector<8x1xf32> to vector<8x8xf32>
    %22 = arith.subf %18, %21 : vector<8x8xf32>
    %23 = math.exp %22 : vector<8x8xf32>
    %cst_11 = arith.constant dense<0.000000e+00> : vector<8xf32>
    %24 = vector.multi_reduction <add>, %23, %cst_11 [1] : vector<8x8xf32> to vector<8xf32>
    %25 = vector.shape_cast %24 : vector<8xf32> to vector<8x1xf32>
    %26 = tpu.reciprocal %25 {approx = true} : vector<8x1xf32> -> vector<8x1xf32>
    %27 = vector.broadcast %26 : vector<8x1xf32> to vector<8x8xf32>
    %28 = arith.mulf %23, %27 : vector<8x8xf32>
    %29 = arith.truncf %28 : vector<8x8xf32> to vector<8x8xbf16>
    %c0_12 = arith.constant 0 : index
    %c0_13 = arith.constant 0 : index
    %c0_14 = arith.constant 0 : index
    %30 = vector.load %arg15[%c0_12, %c0_13, %c0_14] : memref<4x8x8xbf16, #tpu.memory_space<vmem>>, vector<1x8x8xbf16>
    %31 = vector.shape_cast %30 : vector<1x8x8xbf16> to vector<8x8xbf16>
    %cst_15 = arith.constant dense<0.000000e+00> : vector<8x8xf32>
    %32 = tpu.matmul %29, %31, %cst_15 {dimension_numbers = #tpu.dot_dimension_numbers<[1], [0], [0], [1], [0, 0, 1, 1], [], []>} : vector<8x8xbf16>, vector<8x8xbf16>, vector<8x8xf32> -> vector<8x8xf32>
    %c0_16 = arith.constant 0 : index
    %c0_17 = arith.constant 0 : index
    %33 = vector.load %arg16[%c0_16, %c0_17] : memref<8x32xf32, #tpu.memory_space<vmem>>, vector<8x8xf32>
    tpu.vector_store %arg16[%c0_16, %c0_17], %32 {strides = array<i32>} : memref<8x32xf32, #tpu.memory_space<vmem>>, vector<8x8xf32>,
    %34 = vector.extract_strided_slice %13 {offsets = [0, 8], sizes = [8, 8], strides = [1, 1]} : vector<8x32xf32> to vector<8x8xf32>
    %35 = arith.truncf %34 : vector<8x8xf32> to vector<8x8xbf16>
    %c1 = arith.constant 1 : index
    %c0_18 = arith.constant 0 : index
    %c0_19 = arith.constant 0 : index
    %36 = vector.load %arg14[%c1, %c0_18, %c0_19] : memref<4x8x8xbf16, #tpu.memory_space<vmem>>, vector<1x8x8xbf16>
    %37 = vector.shape_cast %36 : vector<1x8x8xbf16> to vector<8x8xbf16>
    %cst_20 = arith.constant dense<0.000000e+00> : vector<8x8xf32>
    %38 = tpu.matmul %35, %37, %cst_20 {dimension_numbers = #tpu.dot_dimension_numbers<[1], [1], [0], [0], [0, 0, 1, 0], [], []>} : vector<8x8xbf16>, vector<8x8xbf16>, vector<8x8xf32> -> vector<8x8xf32>
    %cst_21 = arith.constant dense<0xFF800000> : vector<8xf32>
    %39 = vector.multi_reduction <maximumf>, %38, %cst_21 [1] : vector<8x8xf32> to vector<8xf32>
    %40 = vector.shape_cast %39 : vector<8xf32> to vector<8x1xf32>
    %41 = vector.broadcast %40 : vector<8x1xf32> to vector<8x8xf32>
    %42 = arith.subf %38, %41 : vector<8x8xf32>
    %43 = math.exp %42 : vector<8x8xf32>
    %cst_22 = arith.constant dense<0.000000e+00> : vector<8xf32>
    %44 = vector.multi_reduction <add>, %43, %cst_22 [1] : vector<8x8xf32> to vector<8xf32>
    %45 = vector.shape_cast %44 : vector<8xf32> to vector<8x1xf32>
    %46 = tpu.reciprocal %45 {approx = true} : vector<8x1xf32> -> vector<8x1xf32>
    %47 = vector.broadcast %46 : vector<8x1xf32> to vector<8x8xf32>
    %48 = arith.mulf %43, %47 : vector<8x8xf32>
    %49 = arith.truncf %48 : vector<8x8xf32> to vector<8x8xbf16>
    %c1_23 = arith.constant 1 : index
    %c0_24 = arith.constant 0 : index
    %c0_25 = arith.constant 0 : index
    %50 = vector.load %arg15[%c1_23, %c0_24, %c0_25] : memref<4x8x8xbf16, #tpu.memory_space<vmem>>, vector<1x8x8xbf16>
    %51 = vector.shape_cast %50 : vector<1x8x8xbf16> to vector<8x8xbf16>
    %cst_26 = arith.constant dense<0.000000e+00> : vector<8x8xf32>
    %52 = tpu.matmul %49, %51, %cst_26 {dimension_numbers = #tpu.dot_dimension_numbers<[1], [0], [0], [1], [0, 0, 1, 1], [], []>} : vector<8x8xbf16>, vector<8x8xbf16>, vector<8x8xf32> -> vector<8x8xf32>
    %c0_27 = arith.constant 0 : index
    %c8 = arith.constant 8 : index
    %53 = vector.load %arg16[%c0_27, %c8] : memref<8x32xf32, #tpu.memory_space<vmem>>, vector<8x8xf32>
    tpu.vector_store %arg16[%c0_27, %c8], %52 {strides = array<i32>} : memref<8x32xf32, #tpu.memory_space<vmem>>, vector<8x8xf32>,
    %54 = vector.extract_strided_slice %13 {offsets = [0, 16], sizes = [8, 8], strides = [1, 1]} : vector<8x32xf32> to vector<8x8xf32>
    %55 = arith.truncf %54 : vector<8x8xf32> to vector<8x8xbf16>
    %c2 = arith.constant 2 : index
    %c0_28 = arith.constant 0 : index
    %c0_29 = arith.constant 0 : index
    %56 = vector.load %arg14[%c2, %c0_28, %c0_29] : memref<4x8x8xbf16, #tpu.memory_space<vmem>>, vector<1x8x8xbf16>
    %57 = vector.shape_cast %56 : vector<1x8x8xbf16> to vector<8x8xbf16>
    %cst_30 = arith.constant dense<0.000000e+00> : vector<8x8xf32>
    %58 = tpu.matmul %55, %57, %cst_30 {dimension_numbers = #tpu.dot_dimension_numbers<[1], [1], [0], [0], [0, 0, 1, 0], [], []>} : vector<8x8xbf16>, vector<8x8xbf16>, vector<8x8xf32> -> vector<8x8xf32>
    %cst_31 = arith.constant dense<0xFF800000> : vector<8xf32>
    %59 = vector.multi_reduction <maximumf>, %58, %cst_31 [1] : vector<8x8xf32> to vector<8xf32>
    %60 = vector.shape_cast %59 : vector<8xf32> to vector<8x1xf32>
    %61 = vector.broadcast %60 : vector<8x1xf32> to vector<8x8xf32>
    %62 = arith.subf %58, %61 : vector<8x8xf32>
    %63 = math.exp %62 : vector<8x8xf32>
    %cst_32 = arith.constant dense<0.000000e+00> : vector<8xf32>
    %64 = vector.multi_reduction <add>, %63, %cst_32 [1] : vector<8x8xf32> to vector<8xf32>
    %65 = vector.shape_cast %64 : vector<8xf32> to vector<8x1xf32>
    %66 = tpu.reciprocal %65 {approx = true} : vector<8x1xf32> -> vector<8x1xf32>
    %67 = vector.broadcast %66 : vector<8x1xf32> to vector<8x8xf32>
    %68 = arith.mulf %63, %67 : vector<8x8xf32>
    %69 = arith.truncf %68 : vector<8x8xf32> to vector<8x8xbf16>
    %c2_33 = arith.constant 2 : index
    %c0_34 = arith.constant 0 : index
    %c0_35 = arith.constant 0 : index
    %70 = vector.load %arg15[%c2_33, %c0_34, %c0_35] : memref<4x8x8xbf16, #tpu.memory_space<vmem>>, vector<1x8x8xbf16>
    %71 = vector.shape_cast %70 : vector<1x8x8xbf16> to vector<8x8xbf16>
    %cst_36 = arith.constant dense<0.000000e+00> : vector<8x8xf32>
    %72 = tpu.matmul %69, %71, %cst_36 {dimension_numbers = #tpu.dot_dimension_numbers<[1], [0], [0], [1], [0, 0, 1, 1], [], []>} : vector<8x8xbf16>, vector<8x8xbf16>, vector<8x8xf32> -> vector<8x8xf32>
    %c0_37 = arith.constant 0 : index
    %c16 = arith.constant 16 : index
    %73 = vector.load %arg16[%c0_37, %c16] : memref<8x32xf32, #tpu.memory_space<vmem>>, vector<8x8xf32>
    tpu.vector_store %arg16[%c0_37, %c16], %72 {strides = array<i32>} : memref<8x32xf32, #tpu.memory_space<vmem>>, vector<8x8xf32>,
    %74 = vector.extract_strided_slice %13 {offsets = [0, 24], sizes = [8, 8], strides = [1, 1]} : vector<8x32xf32> to vector<8x8xf32>
    %75 = arith.truncf %74 : vector<8x8xf32> to vector<8x8xbf16>
    %c3 = arith.constant 3 : index
    %c0_38 = arith.constant 0 : index
    %c0_39 = arith.constant 0 : index
    %76 = vector.load %arg14[%c3, %c0_38, %c0_39] : memref<4x8x8xbf16, #tpu.memory_space<vmem>>, vector<1x8x8xbf16>
    %77 = vector.shape_cast %76 : vector<1x8x8xbf16> to vector<8x8xbf16>
    %cst_40 = arith.constant dense<0.000000e+00> : vector<8x8xf32>
    %78 = tpu.matmul %75, %77, %cst_40 {dimension_numbers = #tpu.dot_dimension_numbers<[1], [1], [0], [0], [0, 0, 1, 0], [], []>} : vector<8x8xbf16>, vector<8x8xbf16>, vector<8x8xf32> -> vector<8x8xf32>
    %cst_41 = arith.constant dense<0xFF800000> : vector<8xf32>
    %79 = vector.multi_reduction <maximumf>, %78, %cst_41 [1] : vector<8x8xf32> to vector<8xf32>
    %80 = vector.shape_cast %79 : vector<8xf32> to vector<8x1xf32>
    %81 = vector.broadcast %80 : vector<8x1xf32> to vector<8x8xf32>
    %82 = arith.subf %78, %81 : vector<8x8xf32>
    %83 = math.exp %82 : vector<8x8xf32>
    %cst_42 = arith.constant dense<0.000000e+00> : vector<8xf32>
    %84 = vector.multi_reduction <add>, %83, %cst_42 [1] : vector<8x8xf32> to vector<8xf32>
    %85 = vector.shape_cast %84 : vector<8xf32> to vector<8x1xf32>
    %86 = tpu.reciprocal %85 {approx = true} : vector<8x1xf32> -> vector<8x1xf32>
    %87 = vector.broadcast %86 : vector<8x1xf32> to vector<8x8xf32>
    %88 = arith.mulf %83, %87 : vector<8x8xf32>
    %89 = arith.truncf %88 : vector<8x8xf32> to vector<8x8xbf16>
    %c3_43 = arith.constant 3 : index
    %c0_44 = arith.constant 0 : index
    %c0_45 = arith.constant 0 : index
    %90 = vector.load %arg15[%c3_43, %c0_44, %c0_45] : memref<4x8x8xbf16, #tpu.memory_space<vmem>>, vector<1x8x8xbf16>
    %91 = vector.shape_cast %90 : vector<1x8x8xbf16> to vector<8x8xbf16>
    %cst_46 = arith.constant dense<0.000000e+00> : vector<8x8xf32>
    %92 = tpu.matmul %89, %91, %cst_46 {dimension_numbers = #tpu.dot_dimension_numbers<[1], [0], [0], [1], [0, 0, 1, 1], [], []>} : vector<8x8xbf16>, vector<8x8xbf16>, vector<8x8xf32> -> vector<8x8xf32>
    %c0_47 = arith.constant 0 : index
    %c24 = arith.constant 24 : index
    %93 = vector.load %arg16[%c0_47, %c24] : memref<8x32xf32, #tpu.memory_space<vmem>>, vector<8x8xf32>
    tpu.vector_store %arg16[%c0_47, %c24], %92 {strides = array<i32>} : memref<8x32xf32, #tpu.memory_space<vmem>>, vector<8x8xf32>,
    %c0_48 = arith.constant 0 : index
    %c0_49 = arith.constant 0 : index
    %94 = vector.load %arg16[%c0_48, %c0_49] : memref<8x32xf32, #tpu.memory_space<vmem>>, vector<8x32xf32>
    %95 = arith.truncf %94 : vector<8x32xf32> to vector<8x32xbf16>
    %c0_50 = arith.constant 0 : index
    %c0_51 = arith.constant 0 : index
    %96 = vector.load %arg9[%c0_50, %c0_51] : memref<32x32xbf16, #tpu.memory_space<vmem>>, vector<32x32xbf16>
    %cst_52 = arith.constant dense<0.000000e+00> : vector<8x32xf32>
    %97 = tpu.matmul %95, %96, %cst_52 {dimension_numbers = #tpu.dot_dimension_numbers<[1], [0], [0], [1], [0, 0, 1, 1], [], []>} : vector<8x32xbf16>, vector<32x32xbf16>, vector<8x32xf32> -> vector<8x32xf32>
    %c0_53 = arith.constant 0 : index
    %c0_54 = arith.constant 0 : index
    %98 = vector.load %arg10[%c0_53, %c0_54] : memref<1x32xf32, #tpu.memory_space<vmem>>, vector<1x32xf32>
    %99 = vector.broadcast %98 : vector<1x32xf32> to vector<8x32xf32>
    %100 = arith.addf %97, %99 : vector<8x32xf32>
    %101 = arith.addf %7, %100 : vector<8x32xf32>
    %cst_55 = arith.constant dense<0.000000e+00> : vector<8xf32>
    %102 = vector.multi_reduction <add>, %101, %cst_55 [1] : vector<8x32xf32> to vector<8xf32>
    %103 = vector.shape_cast %102 : vector<8xf32> to vector<8x1xf32>
    %cst_56 = arith.constant 3.200000e+01 : f32
    %104 = vector.broadcast %cst_56 : f32 to vector<8x1xf32>
    %105 = arith.divf %103, %104 : vector<8x1xf32>
    %106 = vector.broadcast %105 : vector<8x1xf32> to vector<8x32xf32>
    %107 = arith.subf %101, %106 : vector<8x32xf32>
    %108 = arith.mulf %107, %107 : vector<8x32xf32>
    %cst_57 = arith.constant dense<0.000000e+00> : vector<8xf32>
    %109 = vector.multi_reduction <add>, %108, %cst_57 [1] : vector<8x32xf32> to vector<8xf32>
    %110 = vector.shape_cast %109 : vector<8xf32> to vector<8x1xf32>
    %cst_58 = arith.constant 3.200000e+01 : f32
    %111 = vector.broadcast %cst_58 : f32 to vector<8x1xf32>
    %112 = arith.divf %110, %111 : vector<8x1xf32>
    %113 = vector.broadcast %105 : vector<8x1xf32> to vector<8x32xf32>
    %114 = arith.subf %101, %113 : vector<8x32xf32>
    %cst_59 = arith.constant 9.99999974E-6 : f32
    %115 = vector.broadcast %cst_59 : f32 to vector<8x1xf32>
    %116 = arith.addf %112, %115 : vector<8x1xf32>
    %117 = math.rsqrt %116 : vector<8x1xf32>
    %118 = vector.broadcast %117 : vector<8x1xf32> to vector<8x32xf32>
    %119 = arith.mulf %114, %118 : vector<8x32xf32>
    %c0_60 = arith.constant 0 : index
    %c0_61 = arith.constant 0 : index
    %120 = vector.load %arg11[%c0_60, %c0_61] : memref<1x32xf32, #tpu.memory_space<vmem>>, vector<1x32xf32>
    %121 = vector.broadcast %120 : vector<1x32xf32> to vector<8x32xf32>
    %122 = arith.mulf %119, %121 : vector<8x32xf32>
    %c0_62 = arith.constant 0 : index
    %c0_63 = arith.constant 0 : index
    %123 = vector.load %arg12[%c0_62, %c0_63] : memref<1x32xf32, #tpu.memory_space<vmem>>, vector<1x32xf32>
    %124 = vector.broadcast %123 : vector<1x32xf32> to vector<8x32xf32>
    %125 = arith.addf %122, %124 : vector<8x32xf32>
    %126 = arith.truncf %125 : vector<8x32xf32> to vector<8x32xbf16>
    %c0_64 = arith.constant 0 : index
    %c0_65 = arith.constant 0 : index
    %c0_66 = arith.constant 0 : index
    %127 = vector.load %arg13[%c0_64, %c0_65, %c0_66] : memref<1x8x32xbf16, #tpu.memory_space<vmem>>, vector<1x8x32xbf16>
    %128 = vector.shape_cast %127 : vector<1x8x32xbf16> to vector<8x32xbf16>
    %129 = vector.shape_cast %126 : vector<8x32xbf16> to vector<1x8x32xbf16>
    tpu.vector_store %arg13[%c0_64, %c0_65, %c0_66], %129 {strides = array<i32>} : memref<1x8x32xbf16, #tpu.memory_space<vmem>>, vector<1x8x32xbf16>,
    return
  }
  func.func @transform_0(%arg0: i32, %arg1: i32) -> (i32, i32, i32) {
    %c0_i32 = arith.constant 0 : i32
    %c0_i32_0 = arith.constant 0 : i32
    %c0_i32_1 = arith.constant 0 : i32
    return %arg0, %c0_i32, %c0_i32_0 : i32, i32, i32
  }
  func.func @transform_1(%arg0: i32, %arg1: i32) -> (i32, i32) {
    %c0_i32 = arith.constant 0 : i32
    %c0_i32_0 = arith.constant 0 : i32
    %c0_i32_1 = arith.constant 0 : i32
    return %c0_i32, %c0_i32_0 : i32, i32
  }
  func.func @transform_2(%arg0: i32, %arg1: i32) -> (i32, i32) {
    %c0_i32 = arith.constant 0 : i32
    %c0_i32_0 = arith.constant 0 : i32
    %c0_i32_1 = arith.constant 0 : i32
    return %c0_i32, %c0_i32_0 : i32, i32
  }
  func.func @transform_3(%arg0: i32, %arg1: i32) -> (i32, i32, i32) {
    %c0_i32 = arith.constant 0 : i32
    %c0_i32_0 = arith.constant 0 : i32
    %c0_i32_1 = arith.constant 0 : i32
    %c0_i32_2 = arith.constant 0 : i32
    return %c0_i32, %c0_i32_0, %c0_i32_1 : i32, i32, i32
  }
  func.func @transform_4(%arg0: i32, %arg1: i32) -> (i32, i32, i32) {
    %c0_i32 = arith.constant 0 : i32
    %c0_i32_0 = arith.constant 0 : i32
    %c0_i32_1 = arith.constant 0 : i32
    %c0_i32_2 = arith.constant 0 : i32
    return %c0_i32, %c0_i32_0, %c0_i32_1 : i32, i32, i32
  }
  func.func @transform_5(%arg0: i32, %arg1: i32) -> (i32, i32, i32) {
    %c0_i32 = arith.constant 0 : i32
    %c0_i32_0 = arith.constant 0 : i32
    %c0_i32_1 = arith.constant 0 : i32
    %c0_i32_2 = arith.constant 0 : i32
    return %c0_i32, %c0_i32_0, %c0_i32_1 : i32, i32, i32
  }
  func.func @transform_6(%arg0: i32, %arg1: i32) -> (i32, i32, i32) {
    %c0_i32 = arith.constant 0 : i32
    %c0_i32_0 = arith.constant 0 : i32
    %c0_i32_1 = arith.constant 0 : i32
    %c0_i32_2 = arith.constant 0 : i32
    return %c0_i32, %c0_i32_0, %c0_i32_1 : i32, i32, i32
  }
  func.func @transform_7(%arg0: i32, %arg1: i32) -> (i32, i32) {
    %c0_i32 = arith.constant 0 : i32
    %c0_i32_0 = arith.constant 0 : i32
    %c0_i32_1 = arith.constant 0 : i32
    return %c0_i32, %c0_i32_0 : i32, i32
  }
  func.func @transform_8(%arg0: i32, %arg1: i32) -> (i32, i32) {
    %c0_i32 = arith.constant 0 : i32
    %c0_i32_0 = arith.constant 0 : i32
    %c0_i32_1 = arith.constant 0 : i32
    return %c0_i32, %c0_i32_0 : i32, i32
  }
  func.func @transform_9(%arg0: i32, %arg1: i32) -> (i32, i32) {
    %c0_i32 = arith.constant 0 : i32
    %c0_i32_0 = arith.constant 0 : i32
    %c0_i32_1 = arith.constant 0 : i32
    return %c0_i32, %c0_i32_0 : i32, i32
  }
  func.func @transform_10(%arg0: i32, %arg1: i32) -> (i32, i32) {
    %c0_i32 = arith.constant 0 : i32
    %c0_i32_0 = arith.constant 0 : i32
    %c0_i32_1 = arith.constant 0 : i32
    return %c0_i32, %c0_i32_0 : i32, i32
  }
  func.func @transform_11(%arg0: i32, %arg1: i32) -> (i32, i32, i32) {
    %c0_i32 = arith.constant 0 : i32
    %c0_i32_0 = arith.constant 0 : i32
    return %arg0, %arg1, %c0_i32 : i32, i32, i32
  }
}

</mosaic_0001>

<llo_original>
// kernel: tpu_custom_call.1
$region0: #{tpu_custom_call.1}
  #allocation0 [shape = 'u32[]', space=smem, size = 0x4, offset = 0x4, fixed_abs, tag = 'smem constant byte address 0x4 - core index']
  #allocation1 [shape = 'u32[144,128]{1,0:T(1,128)}', space=vmem, size = 0x12000, scoped, tag = 'internal scratch']
  #allocation2 [shape = 'bf16[4,8,8]{2,1,0:T(8,128)(2,1)}', space=vmem, size = 0x2000, scoped, tag = 'scratch operand']
  #allocation3 [shape = 'bf16[4,8,8]{2,1,0:T(8,128)(2,1)}', space=vmem, size = 0x2000, scoped, tag = 'scratch operand']
  #allocation4 [shape = 'f32[8,32]{1,0:T(8,128)}', space=vmem, size = 0x1000, scoped, tag = 'scratch operand']
  %s0 = inlined_call_operand.vmem [shape: f32[2,8,32], index: 0, kind: input, shape index: {}]
  %s1 = inlined_call_operand.vmem [shape: bf16[32,32], index: 1, kind: input, shape index: {}]
  %s2 = inlined_call_operand.vmem [shape: f32[1,32], index: 2, kind: input, shape index: {}]
  %s3 = inlined_call_operand.vmem [shape: bf16[4,32,8], index: 3, kind: input, shape index: {}]
  %s4 = inlined_call_operand.vmem [shape: f32[4,1,8], index: 4, kind: input, shape index: {}]
  %s5 = inlined_call_operand.vmem [shape: bf16[4,32,8], index: 5, kind: input, shape index: {}]
  %s6 = inlined_call_operand.vmem [shape: f32[4,1,8], index: 6, kind: input, shape index: {}]
  %s7 = inlined_call_operand.vmem [shape: bf16[32,32], index: 7, kind: input, shape index: {}]
  %s8 = inlined_call_operand.vmem [shape: f32[1,32], index: 8, kind: input, shape index: {}]
  %s9 = inlined_call_operand.vmem [shape: f32[1,32], index: 9, kind: input, shape index: {}]
  %s10 = inlined_call_operand.vmem [shape: f32[1,32], index: 10, kind: input, shape index: {}]
  %s11 = inlined_call_operand.hbm [shape: bf16[2,8,32], index: 11, kind: output, shape index: {}]
  %s12 = sld [smem:[#allocation0]]
  $region81: #{tpu_custom_call.1} parent=0
    _
  %s14 = ssub.s32 1, %s12
  %s15 = scalar_select 0, %s14, %s12
  $region1: #{tpu_custom_call.1} parent=0
    #allocation5 [shape = 'u8[4096]{0}', space=vmem, size = 0x1000, scoped, tag = 'output window, operand 0']
    #allocation6 [shape = 's32[2]{0}', space=sflag, size = 0x8, scoped, tag = 'scoped memory for tpu_custom_call.1']
    %16 = vsyncpa [#allocation6], 0
    %s17 = scalar_lea.sflag [#allocation6], 1
    %18 = vsyncpa %s17, 0
    loop: start=0, step=1, limit=4
    $region2: #{tpu_custom_call.1} parent=1 // loop_pre_header
      _
    $region3: #{tpu_custom_call.1} parent=1 // loop_header
      %s20 = sphi 0, %s24
      %p21 = scmp.ge.s32.totalorder %s20, 4
      %s27 = sphi 0, %s39
      %s28 = sphi 0, %s35
      %s29 = sphi 0, %s27
      %s30 = sphi 0, %s28
      %s31 = sphi 0, %s29
      %s32 = sphi 0, %s30
      %s42 = sphi 0, %s44
      %s45 = sphi 0, %s42
      %s46 = sphi 0, %s45
      %s62 = sphi 0, %s46
      %s66 = sphi 0, %s66
      %s68 = sphi 0, %s66
      %s69 = sphi 0, %s68
      %s83 = sphi 0, %s69
      %s87 = sphi 0, %s87
      %s89 = sphi 0, %s87
      %s90 = sphi 0, %s89
      %s104 = sphi 0, %s90
      %s108 = sphi 0, %s108
      %s110 = sphi 0, %s108
      %s111 = sphi 0, %s110
      %s125 = sphi 0, %s111
      %s129 = sphi 0, %s129
      %s131 = sphi 0, %s129
      %s132 = sphi 0, %s131
      %s146 = sphi 0, %s132
      %s150 = sphi 0, %s150
      %s152 = sphi 0, %s150
      %s153 = sphi 0, %s152
      %s167 = sphi 0, %s153
      %s171 = sphi 0, %s171
      %s173 = sphi 0, %s171
      %s174 = sphi 0, %s173
      %s188 = sphi 0, %s174
      %s192 = sphi 0, %s192
      %s194 = sphi 0, %s192
      %s195 = sphi 0, %s194
      %s209 = sphi 0, %s195
      %s213 = sphi 0, %s213
      %s215 = sphi 0, %s213
      %s216 = sphi 0, %s215
      %s230 = sphi 0, %s216
      %s234 = sphi 0, %s234
      %s236 = sphi 0, %s234
      %s237 = sphi 0, %s236
      %s251 = sphi 0, %s237
      %s255 = sphi 0, %s255
      %s257 = sphi 0, %s255
      %s258 = sphi 0, %s257
      %s272 = sphi 0, %s258
      %s280 = sphi 0, %s282
      %s283 = sphi 0, %s280
      %s284 = sphi 0, %s283
      %s300 = sphi 0, %s284
    $region4: #{tpu_custom_call.1} parent=1 // loop_header_branch
      %23 = sbr.rel (%p21) target = $region8
    $region5: #{tpu_custom_call.1} parent=1 // loop_body
      %s25 = ssub.s32 %s20, 1
      %s26 = ssub.s32 %s20, 2
      %s33 = sadd.s32 1, %s28
      %p34 = scmp.ge.s32.totalorder %s33, 1
      %s35 = scalar_select %p34, 0, %s33
      %s36 = sadd.s32 1, %s27
      %s37 = scalar_select %p34, %s36, %s27
      %p38 = scmp.ge.s32.totalorder %s37, 2
      %s39 = scalar_select %p38, 0, %s37
      %s40 = ssub.s32 %s27, %s39
      %p41 = scmp.eq.s32.totalorder %s40, 0
      %s43 = sadd.s32 %s42, 1
      %s44 = scalar_select %p41, %s42, %s43
      %p47 = pneg %p41
      %p48 = scmp.eq.s32.totalorder %s20, 1
      %p49 = por %p47, %p48
      %p50 = scmp.ne.s32.totalorder %s42, %s45
      %p51 = scmp.eq.s32.totalorder %s20, 0
      %p52 = por %p50, %p51
      %p53 = scmp.ne.s32.totalorder %s42, %s45
      %p54 = scmp.eq.s32.totalorder %s25, 1
      %p55 = por %p53, %p54
      %p56 = scmp.ne.s32.totalorder %s45, %s46
      %p57 = scmp.eq.s32.totalorder %s25, 0
      %p58 = por %p56, %p57
      %p59 = scmp.ne.s32.totalorder %s45, %s46
      %p60 = scmp.eq.s32.totalorder %s26, 1
      %p61 = por %p59, %p60
      %p63 = scmp.ne.s32.totalorder %s46, %s62
      %p64 = scmp.eq.s32.totalorder %s26, 0
      %p65 = por %p63, %p64
      %s67 = sadd.s32 %s66, 1
      %p70 = scmp.eq.s32.totalorder %s20, 1
      %p71 = scmp.ne.s32.totalorder %s66, %s68
      %p72 = scmp.eq.s32.totalorder %s20, 0
      %p73 = por %p71, %p72
      %p74 = scmp.ne.s32.totalorder %s66, %s68
      %p75 = scmp.eq.s32.totalorder %s25, 1
      %p76 = por %p74, %p75
      %p77 = scmp.ne.s32.totalorder %s68, %s69
      %p78 = scmp.eq.s32.totalorder %s25, 0
      %p79 = por %p77, %p78
      %p80 = scmp.ne.s32.totalorder %s68, %s69
      %p81 = scmp.eq.s32.totalorder %s26, 1
      %p82 = por %p80, %p81
      %p84 = scmp.ne.s32.totalorder %s69, %s83
      %p85 = scmp.eq.s32.totalorder %s26, 0
      %p86 = por %p84, %p85
      %s88 = sadd.s32 %s87, 1
      %p91 = scmp.eq.s32.totalorder %s20, 1
      %p92 = scmp.ne.s32.totalorder %s87, %s89
      %p93 = scmp.eq.s32.totalorder %s20, 0
      %p94 = por %p92, %p93
      %p95 = scmp.ne.s32.totalorder %s87, %s89
      %p96 = scmp.eq.s32.totalorder %s25, 1
      %p97 = por %p95, %p96
      %p98 = scmp.ne.s32.totalorder %s89, %s90
      %p99 = scmp.eq.s32.totalorder %s25, 0
      %p100 = por %p98, %p99
      %p101 = scmp.ne.s32.totalorder %s89, %s90
      %p102 = scmp.eq.s32.totalorder %s26, 1
      %p103 = por %p101, %p102
      %p105 = scmp.ne.s32.totalorder %s90, %s104
      %p106 = scmp.eq.s32.totalorder %s26, 0
      %p107 = por %p105, %p106
      %s109 = sadd.s32 %s108, 1
      %p112 = scmp.eq.s32.totalorder %s20, 1
      %p113 = scmp.ne.s32.totalorder %s108, %s110
      %p114 = scmp.eq.s32.totalorder %s20, 0
      %p115 = por %p113, %p114
      %p116 = scmp.ne.s32.totalorder %s108, %s110
      %p117 = scmp.eq.s32.totalorder %s25, 1
      %p118 = por %p116, %p117
      %p119 = scmp.ne.s32.totalorder %s110, %s111
      %p120 = scmp.eq.s32.totalorder %s25, 0
      %p121 = por %p119, %p120
      %p122 = scmp.ne.s32.totalorder %s110, %s111
      %p123 = scmp.eq.s32.totalorder %s26, 1
      %p124 = por %p122, %p123
      %p126 = scmp.ne.s32.totalorder %s111, %s125
      %p127 = scmp.eq.s32.totalorder %s26, 0
      %p128 = por %p126, %p127
      %s130 = sadd.s32 %s129, 1
      %p133 = scmp.eq.s32.totalorder %s20, 1
      %p134 = scmp.ne.s32.totalorder %s129, %s131
      %p135 = scmp.eq.s32.totalorder %s20, 0
      %p136 = por %p134, %p135
      %p137 = scmp.ne.s32.totalorder %s129, %s131
      %p138 = scmp.eq.s32.totalorder %s25, 1
      %p139 = por %p137, %p138
      %p140 = scmp.ne.s32.totalorder %s131, %s132
      %p141 = scmp.eq.s32.totalorder %s25, 0
      %p142 = por %p140, %p141
      %p143 = scmp.ne.s32.totalorder %s131, %s132
      %p144 = scmp.eq.s32.totalorder %s26, 1
      %p145 = por %p143, %p144
      %p147 = scmp.ne.s32.totalorder %s132, %s146
      %p148 = scmp.eq.s32.totalorder %s26, 0
      %p149 = por %p147, %p148
      %s151 = sadd.s32 %s150, 1
      %p154 = scmp.eq.s32.totalorder %s20, 1
      %p155 = scmp.ne.s32.totalorder %s150, %s152
      %p156 = scmp.eq.s32.totalorder %s20, 0
      %p157 = por %p155, %p156
      %p158 = scmp.ne.s32.totalorder %s150, %s152
      %p159 = scmp.eq.s32.totalorder %s25, 1
      %p160 = por %p158, %p159
      %p161 = scmp.ne.s32.totalorder %s152, %s153
      %p162 = scmp.eq.s32.totalorder %s25, 0
      %p163 = por %p161, %p162
      %p164 = scmp.ne.s32.totalorder %s152, %s153
      %p165 = scmp.eq.s32.totalorder %s26, 1
      %p166 = por %p164, %p165
      %p168 = scmp.ne.s32.totalorder %s153, %s167
      %p169 = scmp.eq.s32.totalorder %s26, 0
      %p170 = por %p168, %p169
      %s172 = sadd.s32 %s171, 1
      %p175 = scmp.eq.s32.totalorder %s20, 1
      %p176 = scmp.ne.s32.totalorder %s171, %s173
      %p177 = scmp.eq.s32.totalorder %s20, 0
      %p178 = por %p176, %p177
      %p179 = scmp.ne.s32.totalorder %s171, %s173
      %p180 = scmp.eq.s32.totalorder %s25, 1
      %p181 = por %p179, %p180
      %p182 = scmp.ne.s32.totalorder %s173, %s174
      %p183 = scmp.eq.s32.totalorder %s25, 0
      %p184 = por %p182, %p183
      %p185 = scmp.ne.s32.totalorder %s173, %s174
      %p186 = scmp.eq.s32.totalorder %s26, 1
      %p187 = por %p185, %p186
      %p189 = scmp.ne.s32.totalorder %s174, %s188
      %p190 = scmp.eq.s32.totalorder %s26, 0
      %p191 = por %p189, %p190
      %s193 = sadd.s32 %s192, 1
      %p196 = scmp.eq.s32.totalorder %s20, 1
      %p197 = scmp.ne.s32.totalorder %s192, %s194
      %p198 = scmp.eq.s32.totalorder %s20, 0
      %p199 = por %p197, %p198
      %p200 = scmp.ne.s32.totalorder %s192, %s194
      %p201 = scmp.eq.s32.totalorder %s25, 1
      %p202 = por %p200, %p201
      %p203 = scmp.ne.s32.totalorder %s194, %s195
      %p204 = scmp.eq.s32.totalorder %s25, 0
      %p205 = por %p203, %p204
      %p206 = scmp.ne.s32.totalorder %s194, %s195
      %p207 = scmp.eq.s32.totalorder %s26, 1
      %p208 = por %p206, %p207
      %p210 = scmp.ne.s32.totalorder %s195, %s209
      %p211 = scmp.eq.s32.totalorder %s26, 0
      %p212 = por %p210, %p211
      %s214 = sadd.s32 %s213, 1
      %p217 = scmp.eq.s32.totalorder %s20, 1
      %p218 = scmp.ne.s32.totalorder %s213, %s215
      %p219 = scmp.eq.s32.totalorder %s20, 0
      %p220 = por %p218, %p219
      %p221 = scmp.ne.s32.totalorder %s213, %s215
      %p222 = scmp.eq.s32.totalorder %s25, 1
      %p223 = por %p221, %p222
      %p224 = scmp.ne.s32.totalorder %s215, %s216
      %p225 = scmp.eq.s32.totalorder %s25, 0
      %p226 = por %p224, %p225
      %p227 = scmp.ne.s32.totalorder %s215, %s216
      %p228 = scmp.eq.s32.totalorder %s26, 1
      %p229 = por %p227, %p228
      %p231 = scmp.ne.s32.totalorder %s216, %s230
      %p232 = scmp.eq.s32.totalorder %s26, 0
      %p233 = por %p231, %p232
      %s235 = sadd.s32 %s234, 1
      %p238 = scmp.eq.s32.totalorder %s20, 1
      %p239 = scmp.ne.s32.totalorder %s234, %s236
      %p240 = scmp.eq.s32.totalorder %s20, 0
      %p241 = por %p239, %p240
      %p242 = scmp.ne.s32.totalorder %s234, %s236
      %p243 = scmp.eq.s32.totalorder %s25, 1
      %p244 = por %p242, %p243
      %p245 = scmp.ne.s32.totalorder %s236, %s237
      %p246 = scmp.eq.s32.totalorder %s25, 0
      %p247 = por %p245, %p246
      %p248 = scmp.ne.s32.totalorder %s236, %s237
      %p249 = scmp.eq.s32.totalorder %s26, 1
      %p250 = por %p248, %p249
      %p252 = scmp.ne.s32.totalorder %s237, %s251
      %p253 = scmp.eq.s32.totalorder %s26, 0
      %p254 = por %p252, %p253
      %s256 = sadd.s32 %s255, 1
      %p259 = scmp.eq.s32.totalorder %s20, 1
      %p260 = scmp.ne.s32.totalorder %s255, %s257
      %p261 = scmp.eq.s32.totalorder %s20, 0
      %p262 = por %p260, %p261
      %p263 = scmp.ne.s32.totalorder %s255, %s257
      %p264 = scmp.eq.s32.totalorder %s25, 1
      %p265 = por %p263, %p264
      %p266 = scmp.ne.s32.totalorder %s257, %s258
      %p267 = scmp.eq.s32.totalorder %s25, 0
      %p268 = por %p266, %p267
      %p269 = scmp.ne.s32.totalorder %s257, %s258
      %p270 = scmp.eq.s32.totalorder %s26, 1
      %p271 = por %p269, %p270
      %p273 = scmp.ne.s32.totalorder %s258, %s272
      %p274 = scmp.eq.s32.totalorder %s26, 0
      %p275 = por %p273, %p274
      %s276 = ssub.s32 %s27, %s39
      %s277 = ssub.s32 %s28, %s35
      %s278 = sor.u32 %s276, %s277
      %p279 = scmp.eq.s32.totalorder %s278, 0
      %s281 = sadd.s32 %s280, 1
      %s282 = scalar_select %p279, %s280, %s281
      %p285 = pneg %p279
      %p286 = scmp.eq.s32.totalorder %s20, 1
      %p287 = por %p285, %p286
      %p288 = scmp.ne.s32.totalorder %s280, %s283
      %p289 = scmp.eq.s32.totalorder %s20, 0
      %p290 = por %p288, %p289
      %p291 = scmp.ne.s32.totalorder %s280, %s283
      %p292 = scmp.eq.s32.totalorder %s25, 1
      %p293 = por %p291, %p292
      %p294 = scmp.ne.s32.totalorder %s283, %s284
      %p295 = scmp.eq.s32.totalorder %s25, 0
      %p296 = por %p294, %p295
      %p297 = scmp.ne.s32.totalorder %s283, %s284
      %p298 = scmp.eq.s32.totalorder %s26, 1
      %p299 = por %p297, %p298
      %p301 = scmp.ne.s32.totalorder %s284, %s300
      %p302 = scmp.eq.s32.totalorder %s26, 0
      %p303 = por %p301, %p302
      %p304 = scmp.le.s32.totalorder 1, %s20
      %p305 = scmp.lt.s32.totalorder %s20, 3
      %p306 = pnand %p304, %p305
      %p307 = pneg %p306
      // Predicated region
      $region9: #{tpu_custom_call.1} parent=5 // pred_check
        _
      $region10: #{tpu_custom_call.1} parent=5 // pred_check_branch
        %309 = sbr.rel (%p306) target = $region12
      $region11: #{tpu_custom_call.1} parent=5 // pred_region
        %s310 = ssub.s32 %s20, 1
        // Predicated region
        $region13: #{tpu_custom_call.1} parent=11 // pred_check
          %p311 = pneg %p79
        $region14: #{tpu_custom_call.1} parent=11 // pred_check_branch
          %313 = sbr.rel (%p311) target = $region16
        $region15: #{tpu_custom_call.1} parent=11 // pred_region
          _
        $region16: #{tpu_custom_call.1} parent=11 // pred_fallthru
          _
        // Predicated region
        $region17: #{tpu_custom_call.1} parent=11 // pred_check
          %p314 = pneg %p100
        $region18: #{tpu_custom_call.1} parent=11 // pred_check_branch
          %316 = sbr.rel (%p314) target = $region20
        $region19: #{tpu_custom_call.1} parent=11 // pred_region
          _
        $region20: #{tpu_custom_call.1} parent=11 // pred_fallthru
          _
        // Predicated region
        $region21: #{tpu_custom_call.1} parent=11 // pred_check
          %p317 = pneg %p121
        $region22: #{tpu_custom_call.1} parent=11 // pred_check_branch
          %319 = sbr.rel (%p317) target = $region24
        $region23: #{tpu_custom_call.1} parent=11 // pred_region
          _
        $region24: #{tpu_custom_call.1} parent=11 // pred_fallthru
          _
        // Predicated region
        $region25: #{tpu_custom_call.1} parent=11 // pred_check
          %p320 = pneg %p142
        $region26: #{tpu_custom_call.1} parent=11 // pred_check_branch
          %322 = sbr.rel (%p320) target = $region28
        $region27: #{tpu_custom_call.1} parent=11 // pred_region
          _
        $region28: #{tpu_custom_call.1} parent=11 // pred_fallthru
          _
        // Predicated region
        $region29: #{tpu_custom_call.1} parent=11 // pred_check
          %p323 = pneg %p163
        $region30: #{tpu_custom_call.1} parent=11 // pred_check_branch
          %325 = sbr.rel (%p323) target = $region32
        $region31: #{tpu_custom_call.1} parent=11 // pred_region
          _
        $region32: #{tpu_custom_call.1} parent=11 // pred_fallthru
          _
        // Predicated region
        $region33: #{tpu_custom_call.1} parent=11 // pred_check
          %p326 = pneg %p184
        $region34: #{tpu_custom_call.1} parent=11 // pred_check_branch
          %328 = sbr.rel (%p326) target = $region36
        $region35: #{tpu_custom_call.1} parent=11 // pred_region
          _
        $region36: #{tpu_custom_call.1} parent=11 // pred_fallthru
          _
        // Predicated region
        $region37: #{tpu_custom_call.1} parent=11 // pred_check
          %p329 = pneg %p205
        $region38: #{tpu_custom_call.1} parent=11 // pred_check_branch
          %331 = sbr.rel (%p329) target = $region40
        $region39: #{tpu_custom_call.1} parent=11 // pred_region
          _
        $region40: #{tpu_custom_call.1} parent=11 // pred_fallthru
          _
        // Predicated region
        $region41: #{tpu_custom_call.1} parent=11 // pred_check
          %p332 = pneg %p226
        $region42: #{tpu_custom_call.1} parent=11 // pred_check_branch
          %334 = sbr.rel (%p332) target = $region44
        $region43: #{tpu_custom_call.1} parent=11 // pred_region
          _
        $region44: #{tpu_custom_call.1} parent=11 // pred_fallthru
          _
        // Predicated region
        $region45: #{tpu_custom_call.1} parent=11 // pred_check
          %p335 = pneg %p247
        $region46: #{tpu_custom_call.1} parent=11 // pred_check_branch
          %337 = sbr.rel (%p335) target = $region48
        $region47: #{tpu_custom_call.1} parent=11 // pred_region
          _
        $region48: #{tpu_custom_call.1} parent=11 // pred_fallthru
          _
        // Predicated region
        $region49: #{tpu_custom_call.1} parent=11 // pred_check
          %p338 = pneg %p268
        $region50: #{tpu_custom_call.1} parent=11 // pred_check_branch
          %340 = sbr.rel (%p338) target = $region52
        $region51: #{tpu_custom_call.1} parent=11 // pred_region
          _
        $region52: #{tpu_custom_call.1} parent=11 // pred_fallthru
          _
      $region12: #{tpu_custom_call.1} parent=5 // pred_fallthru
        _
      %p341 = scmp.lt.s32.totalorder %s20, 2
      // Predicated region
      $region53: #{tpu_custom_call.1} parent=5 // pred_check
        %p342 = pneg %p341
      $region54: #{tpu_custom_call.1} parent=5 // pred_check_branch
        %344 = sbr.rel (%p342) target = $region56
      $region55: #{tpu_custom_call.1} parent=5 // pred_region
        // Predicated region
        $region57: #{tpu_custom_call.1} parent=55 // pred_check
          %p345 = pneg %p52
        $region58: #{tpu_custom_call.1} parent=55 // pred_check_branch
          %347 = sbr.rel (%p345) target = $region60
        $region59: #{tpu_custom_call.1} parent=55 // pred_region
          %p348 = scmp.lt.s32.totalorder %s27, 1
          %s349 = scalar_select %p348, %s27, 1
          %s350 = smul.addr %s349, 8
          %s351 = scalar_lea.vmem %s0, %s350
        $region60: #{tpu_custom_call.1} parent=55 // pred_fallthru
          _
      $region56: #{tpu_custom_call.1} parent=5 // pred_fallthru
        _
      %p352 = scmp.le.s32.totalorder 1, %s20
      %p353 = scmp.lt.s32.totalorder %s20, 3
      %p354 = pnand %p352, %p353
      %p355 = pneg %p354
      // Predicated region
      $region61: #{tpu_custom_call.1} parent=5 // pred_check
        _
      $region62: #{tpu_custom_call.1} parent=5 // pred_check_branch
        %357 = sbr.rel (%p354) target = $region64
      $region63: #{tpu_custom_call.1} parent=5 // pred_region
        %s358 = ssub.s32 %s20, 1
        %p359 = scmp.lt.s32.totalorder %s29, 1
        %s360 = scalar_select %p359, %s29, 1
        %s361 = smul.addr %s360, 8
        %s362 = scalar_lea.vmem %s0, %s361
        %p363 = pneg %p58
        %p364 = pneg %p55
        %p365 = pneg %p79
        %p366 = pneg %p76
        %p367 = pneg %p100
        %p368 = pneg %p97
        %p369 = pneg %p121
        %p370 = pneg %p118
        %p371 = pneg %p142
        %p372 = pneg %p139
        %p373 = pneg %p163
        %p374 = pneg %p160
        %p375 = pneg %p184
        %p376 = pneg %p181
        %p377 = pneg %p205
        %p378 = pneg %p202
        %p379 = pneg %p226
        %p380 = pneg %p223
        %p381 = pneg %p247
        %p382 = pneg %p244
        %p383 = pneg %p268
        %p384 = pneg %p265
        %p385 = pneg %p296
        %p386 = pneg %p293
        %s387 = sand.u32 %s283, 1
        %s388 = scalar_lea.sflag [#allocation6], %s387
        %s389 = sand.u32 %s283, 1
        %s390 = smul.addr %s389, 4
        %s391 = scalar_lea.vmem [#allocation5], %s390
        %p392 = scmp.lt.s32.totalorder %s29, 1
        %s393 = scalar_select %p392, %s29, 1
        %s394 = smul.addr %s393, 8
        %s395 = scalar_lea.vmem %s0, %s394
        %p397 = scmp.eq.s32.totalorder %s30, 0
        // Predicated region
        $region65: #{tpu_custom_call.1} parent=63 // pred_check
          %p398 = pneg %p397
        $region66: #{tpu_custom_call.1} parent=63 // pred_check_branch
          %400 = sbr.rel (%p398) target = $region68
        $region67: #{tpu_custom_call.1} parent=63 // pred_region
          %v401 = vld [vmem:[%s395] sm:$0xff]
          %v402 = vpack.c.bf16 %v401, %v401
          %v403 = vld [vmem:[%s3] sm:$0xf]
          %v404 = vld [vmem:[%s3 + $0x4] sm:$0xf]
          %v405 = vld [vmem:[%s3 + $0x8] sm:$0xf]
          %v406 = vld [vmem:[%s3 + $0xc] sm:$0xf]
          %v407 = vld [vmem:[%s4] sm:$0x1]
          %v409 = vlaneseq
          %v410 = vshrl.u32 %v409, 7
          %v411 = vsub.s32 0, %v410
          %v412 = vrot.slane %v407, %v411
          %v418 = vunpack.c.l.b16 %v403
          %v419 = vunpack.c.l.b16 %v404
          %v420 = vunpack.c.l.b16 %v405
          %v421 = vunpack.c.l.b16 %v406
          %v422 = vpack.c.b16 %v419, %v418
          %v423 = vpack.c.b16 %v421, %v420
          %vm426 = vcmask 261120
          %v428 = vsel %vm426, %v402, 0
          %430 = vmatprep.subr.bf16.mxu0 0
          %431 = vmatpush1.bf16.msra.mxu0 %v422
          %432 = vmatprep.subr.bf16.mxu0 0
          %433 = vmatpush1.bf16.msra.mxu0 %v423
          %434 = vmatprep.subr.bf16.mxu0 0
          %435 = vmatpush1.bf16.msra.mxu0 0
          %436 = vmatprep.subr.bf16.mxu0 0
          %437 = vmatpush1.bf16.msra.mxu0 0
          %438 = vmatprep.subr.bf16.mxu0 0
          %439 = vmatpush1.bf16.msra.mxu0 0
          %440 = vmatprep.subr.bf16.mxu0 0
          %441 = vmatpush1.bf16.msra.mxu0 0
          %442 = vmatprep.subr.bf16.mxu0 0
          %443 = vmatpush1.bf16.msra.mxu0 0
          %444 = vmatprep.subr.bf16.mxu0 0
          %445 = vmatpush1.bf16.msra.mxu0 0
          %446 = vmatprep.subr.bf16.mxu0 0
          %447 = vmatpush1.bf16.msra.mxu0 0
          %448 = vmatprep.subr.bf16.mxu0 0
          %449 = vmatpush1.bf16.msra.mxu0 0
          %450 = vmatprep.subr.bf16.mxu0 0
          %451 = vmatpush1.bf16.msra.mxu0 0
          %452 = vmatprep.subr.bf16.mxu0 0
          %453 = vmatpush1.bf16.msra.mxu0 0
          %454 = vmatprep.subr.bf16.mxu0 0
          %455 = vmatpush1.bf16.msra.mxu0 0
          %456 = vmatprep.subr.bf16.mxu0 0
          %457 = vmatpush1.bf16.msra.mxu0 0
          %458 = vmatprep.subr.bf16.mxu0 0
          %459 = vmatpush1.bf16.msra.mxu0 0
          %460 = vmatprep.subr.bf16.mxu0 0
          %461 = vmatpush1.bf16.msra.mxu0 0
          %462 = vmatprep.mubr.bf16.mxu0 0
          %463 = vmatmul.mubr.bf16.gmra.mrb[0].mxu0 %v428
          %v464 = vpop.f32.mrb[0].mxu0
          %v465 = vadd.f32 %v412, %v464
          %v466 = vpop.f32.mrb[0].mxu0
          %v467 = vpop.f32.mrb[0].mxu0
          %v468 = vpop.f32.mrb[0].mxu0
          %469 = vdwg.mxu0
          %v470 = vpack.c.bf16 %v465, %v465
          %vm471 = vcmask 60416
          %472 = vst.msk [vmem:[#allocation2] sm:$0xf] %vm471, %v470
          %v473 = vld [vmem:[%s5] sm:$0xf]
          %v474 = vld [vmem:[%s5 + $0x4] sm:$0xf]
          %v475 = vld [vmem:[%s5 + $0x8] sm:$0xf]
          %v476 = vld [vmem:[%s5 + $0xc] sm:$0xf]
          %v477 = vld [vmem:[%s6] sm:$0x1]
          %v479 = vlaneseq
          %v480 = vshrl.u32 %v479, 7
          %v481 = vsub.s32 0, %v480
          %v482 = vrot.slane %v477, %v481
          %v488 = vunpack.c.l.b16 %v473
          %v489 = vunpack.c.l.b16 %v474
          %v490 = vunpack.c.l.b16 %v475
          %v491 = vunpack.c.l.b16 %v476
          %v492 = vpack.c.b16 %v489, %v488
          %v493 = vpack.c.b16 %v491, %v490
          %496 = vmatprep.subr.bf16.mxu0 0
          %497 = vmatpush1.bf16.msra.mxu0 %v492
          %498 = vmatprep.subr.bf16.mxu0 0
          %499 = vmatpush1.bf16.msra.mxu0 %v493
          %500 = vmatprep.subr.bf16.mxu0 0
          %501 = vmatpush1.bf16.msra.mxu0 0
          %502 = vmatprep.subr.bf16.mxu0 0
          %503 = vmatpush1.bf16.msra.mxu0 0
          %504 = vmatprep.subr.bf16.mxu0 0
          %505 = vmatpush1.bf16.msra.mxu0 0
          %506 = vmatprep.subr.bf16.mxu0 0
          %507 = vmatpush1.bf16.msra.mxu0 0
          %508 = vmatprep.subr.bf16.mxu0 0
          %509 = vmatpush1.bf16.msra.mxu0 0
          %510 = vmatprep.subr.bf16.mxu0 0
          %511 = vmatpush1.bf16.msra.mxu0 0
          %512 = vmatprep.subr.bf16.mxu0 0
          %513 = vmatpush1.bf16.msra.mxu0 0
          %514 = vmatprep.subr.bf16.mxu0 0
          %515 = vmatpush1.bf16.msra.mxu0 0
          %516 = vmatprep.subr.bf16.mxu0 0
          %517 = vmatpush1.bf16.msra.mxu0 0
          %518 = vmatprep.subr.bf16.mxu0 0
          %519 = vmatpush1.bf16.msra.mxu0 0
          %520 = vmatprep.subr.bf16.mxu0 0
          %521 = vmatpush1.bf16.msra.mxu0 0
          %522 = vmatprep.subr.bf16.mxu0 0
          %523 = vmatpush1.bf16.msra.mxu0 0
          %524 = vmatprep.subr.bf16.mxu0 0
          %525 = vmatpush1.bf16.msra.mxu0 0
          %526 = vmatprep.subr.bf16.mxu0 0
          %527 = vmatpush1.bf16.msra.mxu0 0
          %528 = vmatprep.mubr.bf16.mxu0 0
          %529 = vmatmul.mubr.bf16.gmra.mrb[0].mxu0 %v428
          %v530 = vpop.f32.mrb[0].mxu0
          %v531 = vadd.f32 %v482, %v530
          %v532 = vpop.f32.mrb[0].mxu0
          %v533 = vpop.f32.mrb[0].mxu0
          %v534 = vpop.f32.mrb[0].mxu0
          %535 = vdwg.mxu0
          %v536 = vpack.c.bf16 %v531, %v531
          %537 = vst.msk [vmem:[#allocation3] sm:$0xf] %vm471, %v536
          %s538 = scalar_lea.vmem %s3, 16
          %v539 = vld [vmem:[%s538] sm:$0xf]
          %v540 = vld [vmem:[%s538 + $0x4] sm:$0xf]
          %v541 = vld [vmem:[%s538 + $0x8] sm:$0xf]
          %v542 = vld [vmem:[%s538 + $0xc] sm:$0xf]
          %s543 = scalar_lea.vmem %s4, 1
          %v544 = vld [vmem:[%s543] sm:$0x1]
          %v546 = vlaneseq
          %v547 = vshrl.u32 %v546, 7
          %v548 = vsub.s32 0, %v547
          %v549 = vrot.slane %v544, %v548
          %v555 = vunpack.c.l.b16 %v539
          %v556 = vunpack.c.l.b16 %v540
          %v557 = vunpack.c.l.b16 %v541
          %v558 = vunpack.c.l.b16 %v542
          %v559 = vpack.c.b16 %v556, %v555
          %v560 = vpack.c.b16 %v558, %v557
          %563 = vmatprep.subr.bf16.mxu0 0
          %564 = vmatpush1.bf16.msra.mxu0 %v559
          %565 = vmatprep.subr.bf16.mxu0 0
          %566 = vmatpush1.bf16.msra.mxu0 %v560
          %567 = vmatprep.subr.bf16.mxu0 0
          %568 = vmatpush1.bf16.msra.mxu0 0
          %569 = vmatprep.subr.bf16.mxu0 0
          %570 = vmatpush1.bf16.msra.mxu0 0
          %571 = vmatprep.subr.bf16.mxu0 0
          %572 = vmatpush1.bf16.msra.mxu0 0
          %573 = vmatprep.subr.bf16.mxu0 0
          %574 = vmatpush1.bf16.msra.mxu0 0
          %575 = vmatprep.subr.bf16.mxu0 0
          %576 = vmatpush1.bf16.msra.mxu0 0
          %577 = vmatprep.subr.bf16.mxu0 0
          %578 = vmatpush1.bf16.msra.mxu0 0
          %579 = vmatprep.subr.bf16.mxu0 0
          %580 = vmatpush1.bf16.msra.mxu0 0
          %581 = vmatprep.subr.bf16.mxu0 0
          %582 = vmatpush1.bf16.msra.mxu0 0
          %583 = vmatprep.subr.bf16.mxu0 0
          %584 = vmatpush1.bf16.msra.mxu0 0
          %585 = vmatprep.subr.bf16.mxu0 0
          %586 = vmatpush1.bf16.msra.mxu0 0
          %587 = vmatprep.subr.bf16.mxu0 0
          %588 = vmatpush1.bf16.msra.mxu0 0
          %589 = vmatprep.subr.bf16.mxu0 0
          %590 = vmatpush1.bf16.msra.mxu0 0
          %591 = vmatprep.subr.bf16.mxu0 0
          %592 = vmatpush1.bf16.msra.mxu0 0
          %593 = vmatprep.subr.bf16.mxu0 0
          %594 = vmatpush1.bf16.msra.mxu0 0
          %595 = vmatprep.mubr.bf16.mxu0 0
          %596 = vmatmul.mubr.bf16.gmra.mrb[0].mxu0 %v428
          %v597 = vpop.f32.mrb[0].mxu0
          %v598 = vadd.f32 %v549, %v597
          %v599 = vpop.f32.mrb[0].mxu0
          %v600 = vpop.f32.mrb[0].mxu0
          %v601 = vpop.f32.mrb[0].mxu0
          %602 = vdwg.mxu0
          %v603 = vpack.c.bf16 %v598, %v598
          %s604 = scalar_lea.vmem [#allocation2], 4
          %605 = vst.msk [vmem:[%s604] sm:$0xf] %vm471, %v603
          %s606 = scalar_lea.vmem %s5, 16
          %v607 = vld [vmem:[%s606] sm:$0xf]
          %v608 = vld [vmem:[%s606 + $0x4] sm:$0xf]
          %v609 = vld [vmem:[%s606 + $0x8] sm:$0xf]
          %v610 = vld [vmem:[%s606 + $0xc] sm:$0xf]
          %s611 = scalar_lea.vmem %s6, 1
          %v612 = vld [vmem:[%s611] sm:$0x1]
          %v614 = vlaneseq
          %v615 = vshrl.u32 %v614, 7
          %v616 = vsub.s32 0, %v615
          %v617 = vrot.slane %v612, %v616
          %v623 = vunpack.c.l.b16 %v607
          %v624 = vunpack.c.l.b16 %v608
          %v625 = vunpack.c.l.b16 %v609
          %v626 = vunpack.c.l.b16 %v610
          %v627 = vpack.c.b16 %v624, %v623
          %v628 = vpack.c.b16 %v626, %v625
          %631 = vmatprep.subr.bf16.mxu0 0
          %632 = vmatpush1.bf16.msra.mxu0 %v627
          %633 = vmatprep.subr.bf16.mxu0 0
          %634 = vmatpush1.bf16.msra.mxu0 %v628
          %635 = vmatprep.subr.bf16.mxu0 0
          %636 = vmatpush1.bf16.msra.mxu0 0
          %637 = vmatprep.subr.bf16.mxu0 0
          %638 = vmatpush1.bf16.msra.mxu0 0
          %639 = vmatprep.subr.bf16.mxu0 0
          %640 = vmatpush1.bf16.msra.mxu0 0
          %641 = vmatprep.subr.bf16.mxu0 0
          %642 = vmatpush1.bf16.msra.mxu0 0
          %643 = vmatprep.subr.bf16.mxu0 0
          %644 = vmatpush1.bf16.msra.mxu0 0
          %645 = vmatprep.subr.bf16.mxu0 0
          %646 = vmatpush1.bf16.msra.mxu0 0
          %647 = vmatprep.subr.bf16.mxu0 0
          %648 = vmatpush1.bf16.msra.mxu0 0
          %649 = vmatprep.subr.bf16.mxu0 0
          %650 = vmatpush1.bf16.msra.mxu0 0
          %651 = vmatprep.subr.bf16.mxu0 0
          %652 = vmatpush1.bf16.msra.mxu0 0
          %653 = vmatprep.subr.bf16.mxu0 0
          %654 = vmatpush1.bf16.msra.mxu0 0
          %655 = vmatprep.subr.bf16.mxu0 0
          %656 = vmatpush1.bf16.msra.mxu0 0
          %657 = vmatprep.subr.bf16.mxu0 0
          %658 = vmatpush1.bf16.msra.mxu0 0
          %659 = vmatprep.subr.bf16.mxu0 0
          %660 = vmatpush1.bf16.msra.mxu0 0
          %661 = vmatprep.subr.bf16.mxu0 0
          %662 = vmatpush1.bf16.msra.mxu0 0
          %663 = vmatprep.mubr.bf16.mxu0 0
          %664 = vmatmul.mubr.bf16.gmra.mrb[0].mxu0 %v428
          %v665 = vpop.f32.mrb[0].mxu0
          %v666 = vadd.f32 %v617, %v665
          %v667 = vpop.f32.mrb[0].mxu0
          %v668 = vpop.f32.mrb[0].mxu0
          %v669 = vpop.f32.mrb[0].mxu0
          %670 = vdwg.mxu0
          %v671 = vpack.c.bf16 %v666, %v666
          %s672 = scalar_lea.vmem [#allocation3], 4
          %673 = vst.msk [vmem:[%s672] sm:$0xf] %vm471, %v671
          %s674 = scalar_lea.vmem %s3, 32
          %v675 = vld [vmem:[%s674] sm:$0xf]
          %v676 = vld [vmem:[%s674 + $0x4] sm:$0xf]
          %v677 = vld [vmem:[%s674 + $0x8] sm:$0xf]
          %v678 = vld [vmem:[%s674 + $0xc] sm:$0xf]
          %s679 = scalar_lea.vmem %s4, 2
          %v680 = vld [vmem:[%s679] sm:$0x1]
          %v682 = vlaneseq
          %v683 = vshrl.u32 %v682, 7
          %v684 = vsub.s32 0, %v683
          %v685 = vrot.slane %v680, %v684
          %v691 = vunpack.c.l.b16 %v675
          %v692 = vunpack.c.l.b16 %v676
          %v693 = vunpack.c.l.b16 %v677
          %v694 = vunpack.c.l.b16 %v678
          %v695 = vpack.c.b16 %v692, %v691
          %v696 = vpack.c.b16 %v694, %v693
          %699 = vmatprep.subr.bf16.mxu0 0
          %700 = vmatpush1.bf16.msra.mxu0 %v695
          %701 = vmatprep.subr.bf16.mxu0 0
          %702 = vmatpush1.bf16.msra.mxu0 %v696
          %703 = vmatprep.subr.bf16.mxu0 0
          %704 = vmatpush1.bf16.msra.mxu0 0
          %705 = vmatprep.subr.bf16.mxu0 0
          %706 = vmatpush1.bf16.msra.mxu0 0
          %707 = vmatprep.subr.bf16.mxu0 0
          %708 = vmatpush1.bf16.msra.mxu0 0
          %709 = vmatprep.subr.bf16.mxu0 0
          %710 = vmatpush1.bf16.msra.mxu0 0
          %711 = vmatprep.subr.bf16.mxu0 0
          %712 = vmatpush1.bf16.msra.mxu0 0
          %713 = vmatprep.subr.bf16.mxu0 0
          %714 = vmatpush1.bf16.msra.mxu0 0
          %715 = vmatprep.subr.bf16.mxu0 0
          %716 = vmatpush1.bf16.msra.mxu0 0
          %717 = vmatprep.subr.bf16.mxu0 0
          %718 = vmatpush1.bf16.msra.mxu0 0
          %719 = vmatprep.subr.bf16.mxu0 0
          %720 = vmatpush1.bf16.msra.mxu0 0
          %721 = vmatprep.subr.bf16.mxu0 0
          %722 = vmatpush1.bf16.msra.mxu0 0
          %723 = vmatprep.subr.bf16.mxu0 0
          %724 = vmatpush1.bf16.msra.mxu0 0
          %725 = vmatprep.subr.bf16.mxu0 0
          %726 = vmatpush1.bf16.msra.mxu0 0
          %727 = vmatprep.subr.bf16.mxu0 0
          %728 = vmatpush1.bf16.msra.mxu0 0
          %729 = vmatprep.subr.bf16.mxu0 0
          %730 = vmatpush1.bf16.msra.mxu0 0
          %731 = vmatprep.mubr.bf16.mxu0 0
          %732 = vmatmul.mubr.bf16.gmra.mrb[0].mxu0 %v428
          %v733 = vpop.f32.mrb[0].mxu0
          %v734 = vadd.f32 %v685, %v733
          %v735 = vpop.f32.mrb[0].mxu0
          %v736 = vpop.f32.mrb[0].mxu0
          %v737 = vpop.f32.mrb[0].mxu0
          %738 = vdwg.mxu0
          %v739 = vpack.c.bf16 %v734, %v734
          %s740 = scalar_lea.vmem [#allocation2], 8
          %741 = vst.msk [vmem:[%s740] sm:$0xf] %vm471, %v739
          %s742 = scalar_lea.vmem %s5, 32
          %v743 = vld [vmem:[%s742] sm:$0xf]
          %v744 = vld [vmem:[%s742 + $0x4] sm:$0xf]
          %v745 = vld [vmem:[%s742 + $0x8] sm:$0xf]
          %v746 = vld [vmem:[%s742 + $0xc] sm:$0xf]
          %s747 = scalar_lea.vmem %s6, 2
          %v748 = vld [vmem:[%s747] sm:$0x1]
          %v750 = vlaneseq
          %v751 = vshrl.u32 %v750, 7
          %v752 = vsub.s32 0, %v751
          %v753 = vrot.slane %v748, %v752
          %v759 = vunpack.c.l.b16 %v743
          %v760 = vunpack.c.l.b16 %v744
          %v761 = vunpack.c.l.b16 %v745
          %v762 = vunpack.c.l.b16 %v746
          %v763 = vpack.c.b16 %v760, %v759
          %v764 = vpack.c.b16 %v762, %v761
          %767 = vmatprep.subr.bf16.mxu0 0
          %768 = vmatpush1.bf16.msra.mxu0 %v763
          %769 = vmatprep.subr.bf16.mxu0 0
          %770 = vmatpush1.bf16.msra.mxu0 %v764
          %771 = vmatprep.subr.bf16.mxu0 0
          %772 = vmatpush1.bf16.msra.mxu0 0
          %773 = vmatprep.subr.bf16.mxu0 0
          %774 = vmatpush1.bf16.msra.mxu0 0
          %775 = vmatprep.subr.bf16.mxu0 0
          %776 = vmatpush1.bf16.msra.mxu0 0
          %777 = vmatprep.subr.bf16.mxu0 0
          %778 = vmatpush1.bf16.msra.mxu0 0
          %779 = vmatprep.subr.bf16.mxu0 0
          %780 = vmatpush1.bf16.msra.mxu0 0
          %781 = vmatprep.subr.bf16.mxu0 0
          %782 = vmatpush1.bf16.msra.mxu0 0
          %783 = vmatprep.subr.bf16.mxu0 0
          %784 = vmatpush1.bf16.msra.mxu0 0
          %785 = vmatprep.subr.bf16.mxu0 0
          %786 = vmatpush1.bf16.msra.mxu0 0
          %787 = vmatprep.subr.bf16.mxu0 0
          %788 = vmatpush1.bf16.msra.mxu0 0
          %789 = vmatprep.subr.bf16.mxu0 0
          %790 = vmatpush1.bf16.msra.mxu0 0
          %791 = vmatprep.subr.bf16.mxu0 0
          %792 = vmatpush1.bf16.msra.mxu0 0
          %793 = vmatprep.subr.bf16.mxu0 0
          %794 = vmatpush1.bf16.msra.mxu0 0
          %795 = vmatprep.subr.bf16.mxu0 0
          %796 = vmatpush1.bf16.msra.mxu0 0
          %797 = vmatprep.subr.bf16.mxu0 0
          %798 = vmatpush1.bf16.msra.mxu0 0
          %799 = vmatprep.mubr.bf16.mxu0 0
          %800 = vmatmul.mubr.bf16.gmra.mrb[0].mxu0 %v428
          %v801 = vpop.f32.mrb[0].mxu0
          %v802 = vadd.f32 %v753, %v801
          %v803 = vpop.f32.mrb[0].mxu0
          %v804 = vpop.f32.mrb[0].mxu0
          %v805 = vpop.f32.mrb[0].mxu0
          %806 = vdwg.mxu0
          %v807 = vpack.c.bf16 %v802, %v802
          %s808 = scalar_lea.vmem [#allocation3], 8
          %809 = vst.msk [vmem:[%s808] sm:$0xf] %vm471, %v807
          %s810 = scalar_lea.vmem %s3, 48
          %v811 = vld [vmem:[%s810] sm:$0xf]
          %v812 = vld [vmem:[%s810 + $0x4] sm:$0xf]
          %v813 = vld [vmem:[%s810 + $0x8] sm:$0xf]
          %v814 = vld [vmem:[%s810 + $0xc] sm:$0xf]
          %s815 = scalar_lea.vmem %s4, 3
          %v816 = vld [vmem:[%s815] sm:$0x1]
          %v818 = vlaneseq
          %v819 = vshrl.u32 %v818, 7
          %v820 = vsub.s32 0, %v819
          %v821 = vrot.slane %v816, %v820
          %v827 = vunpack.c.l.b16 %v811
          %v828 = vunpack.c.l.b16 %v812
          %v829 = vunpack.c.l.b16 %v813
          %v830 = vunpack.c.l.b16 %v814
          %v831 = vpack.c.b16 %v828, %v827
          %v832 = vpack.c.b16 %v830, %v829
          %835 = vmatprep.subr.bf16.mxu0 0
          %836 = vmatpush1.bf16.msra.mxu0 %v831
          %837 = vmatprep.subr.bf16.mxu0 0
          %838 = vmatpush1.bf16.msra.mxu0 %v832
          %839 = vmatprep.subr.bf16.mxu0 0
          %840 = vmatpush1.bf16.msra.mxu0 0
          %841 = vmatprep.subr.bf16.mxu0 0
          %842 = vmatpush1.bf16.msra.mxu0 0
          %843 = vmatprep.subr.bf16.mxu0 0
          %844 = vmatpush1.bf16.msra.mxu0 0
          %845 = vmatprep.subr.bf16.mxu0 0
          %846 = vmatpush1.bf16.msra.mxu0 0
          %847 = vmatprep.subr.bf16.mxu0 0
          %848 = vmatpush1.bf16.msra.mxu0 0
          %849 = vmatprep.subr.bf16.mxu0 0
          %850 = vmatpush1.bf16.msra.mxu0 0
          %851 = vmatprep.subr.bf16.mxu0 0
          %852 = vmatpush1.bf16.msra.mxu0 0
          %853 = vmatprep.subr.bf16.mxu0 0
          %854 = vmatpush1.bf16.msra.mxu0 0
          %855 = vmatprep.subr.bf16.mxu0 0
          %856 = vmatpush1.bf16.msra.mxu0 0
          %857 = vmatprep.subr.bf16.mxu0 0
          %858 = vmatpush1.bf16.msra.mxu0 0
          %859 = vmatprep.subr.bf16.mxu0 0
          %860 = vmatpush1.bf16.msra.mxu0 0
          %861 = vmatprep.subr.bf16.mxu0 0
          %862 = vmatpush1.bf16.msra.mxu0 0
          %863 = vmatprep.subr.bf16.mxu0 0
          %864 = vmatpush1.bf16.msra.mxu0 0
          %865 = vmatprep.subr.bf16.mxu0 0
          %866 = vmatpush1.bf16.msra.mxu0 0
          %867 = vmatprep.mubr.bf16.mxu0 0
          %868 = vmatmul.mubr.bf16.gmra.mrb[0].mxu0 %v428
          %v869 = vpop.f32.mrb[0].mxu0
          %v870 = vadd.f32 %v821, %v869
          %v871 = vpop.f32.mrb[0].mxu0
          %v872 = vpop.f32.mrb[0].mxu0
          %v873 = vpop.f32.mrb[0].mxu0
          %874 = vdwg.mxu0
          %v875 = vpack.c.bf16 %v870, %v870
          %s876 = scalar_lea.vmem [#allocation2], 12
          %877 = vst.msk [vmem:[%s876] sm:$0xf] %vm471, %v875
          %s878 = scalar_lea.vmem %s5, 48
          %v879 = vld [vmem:[%s878] sm:$0xf]
          %v880 = vld [vmem:[%s878 + $0x4] sm:$0xf]
          %v881 = vld [vmem:[%s878 + $0x8] sm:$0xf]
          %v882 = vld [vmem:[%s878 + $0xc] sm:$0xf]
          %s883 = scalar_lea.vmem %s6, 3
          %v884 = vld [vmem:[%s883] sm:$0x1]
          %v886 = vlaneseq
          %v887 = vshrl.u32 %v886, 7
          %v888 = vsub.s32 0, %v887
          %v889 = vrot.slane %v884, %v888
          %v895 = vunpack.c.l.b16 %v879
          %v896 = vunpack.c.l.b16 %v880
          %v897 = vunpack.c.l.b16 %v881
          %v898 = vunpack.c.l.b16 %v882
          %v899 = vpack.c.b16 %v896, %v895
          %v900 = vpack.c.b16 %v898, %v897
          %903 = vmatprep.subr.bf16.mxu0 0
          %904 = vmatpush1.bf16.msra.mxu0 %v899
          %905 = vmatprep.subr.bf16.mxu0 0
          %906 = vmatpush1.bf16.msra.mxu0 %v900
          %907 = vmatprep.subr.bf16.mxu0 0
          %908 = vmatpush1.bf16.msra.mxu0 0
          %909 = vmatprep.subr.bf16.mxu0 0
          %910 = vmatpush1.bf16.msra.mxu0 0
          %911 = vmatprep.subr.bf16.mxu0 0
          %912 = vmatpush1.bf16.msra.mxu0 0
          %913 = vmatprep.subr.bf16.mxu0 0
          %914 = vmatpush1.bf16.msra.mxu0 0
          %915 = vmatprep.subr.bf16.mxu0 0
          %916 = vmatpush1.bf16.msra.mxu0 0
          %917 = vmatprep.subr.bf16.mxu0 0
          %918 = vmatpush1.bf16.msra.mxu0 0
          %919 = vmatprep.subr.bf16.mxu0 0
          %920 = vmatpush1.bf16.msra.mxu0 0
          %921 = vmatprep.subr.bf16.mxu0 0
          %922 = vmatpush1.bf16.msra.mxu0 0
          %923 = vmatprep.subr.bf16.mxu0 0
          %924 = vmatpush1.bf16.msra.mxu0 0
          %925 = vmatprep.subr.bf16.mxu0 0
          %926 = vmatpush1.bf16.msra.mxu0 0
          %927 = vmatprep.subr.bf16.mxu0 0
          %928 = vmatpush1.bf16.msra.mxu0 0
          %929 = vmatprep.subr.bf16.mxu0 0
          %930 = vmatpush1.bf16.msra.mxu0 0
          %931 = vmatprep.subr.bf16.mxu0 0
          %932 = vmatpush1.bf16.msra.mxu0 0
          %933 = vmatprep.subr.bf16.mxu0 0
          %934 = vmatpush1.bf16.msra.mxu0 0
          %935 = vmatprep.mubr.bf16.mxu0 0
          %936 = vmatmul.mubr.bf16.gmra.mrb[0].mxu0 %v428
          %v937 = vpop.f32.mrb[0].mxu0
          %v938 = vadd.f32 %v889, %v937
          %v939 = vpop.f32.mrb[0].mxu0
          %v940 = vpop.f32.mrb[0].mxu0
          %v941 = vpop.f32.mrb[0].mxu0
          %942 = vdwg.mxu0
          %v943 = vpack.c.bf16 %v938, %v938
          %s944 = scalar_lea.vmem [#allocation3], 12
          %945 = vst.msk [vmem:[%s944] sm:$0xf] %vm471, %v943
        $region68: #{tpu_custom_call.1} parent=63 // pred_fallthru
          _
        %s946 = smul.u32 %s30, 8
        %s947 = scalar_lea.vmem %s395, %s946
        %v948 = vld [vmem:[%s947] sm:$0xff]
        %v949 = vpack.c.bf16 %v948, %v948
        %v950 = vld [vmem:[%s1] sm:$0xf]
        %v951 = vld [vmem:[%s1 + $0x4] sm:$0xf]
        %v952 = vld [vmem:[%s1 + $0x8] sm:$0xf]
        %v953 = vld [vmem:[%s1 + $0xc] sm:$0xf]
        %v954 = vld [vmem:[%s2] sm:$0x1]
        %v956 = vlaneseq
        %v957 = vshrl.u32 %v956, 7
        %v958 = vsub.s32 0, %v957
        %v959 = vrot.slane %v954, %v958
        %v965 = vunpack.c.l.b16 %v950
        %v966 = vunpack.c.l.b16 %v951
        %v967 = vunpack.c.l.b16 %v952
        %v968 = vunpack.c.l.b16 %v953
        %v969 = vpack.c.b16 %v966, %v965
        %v970 = vpack.c.b16 %v968, %v967
        %vm973 = vcmask 261120
        %v975 = vsel %vm973, %v949, 0
        %977 = vmatprep.subr.bf16.mxu0 0
        %978 = vmatpush1.bf16.msra.mxu0 %v969
        %979 = vmatprep.subr.bf16.mxu0 0
        %980 = vmatpush1.bf16.msra.mxu0 %v970
        %981 = vmatprep.subr.bf16.mxu0 0
        %982 = vmatpush1.bf16.msra.mxu0 0
        %983 = vmatprep.subr.bf16.mxu0 0
        %984 = vmatpush1.bf16.msra.mxu0 0
        %985 = vmatprep.subr.bf16.mxu0 0
        %986 = vmatpush1.bf16.msra.mxu0 0
        %987 = vmatprep.subr.bf16.mxu0 0
        %988 = vmatpush1.bf16.msra.mxu0 0
        %989 = vmatprep.subr.bf16.mxu0 0
        %990 = vmatpush1.bf16.msra.mxu0 0
        %991 = vmatprep.subr.bf16.mxu0 0
        %992 = vmatpush1.bf16.msra.mxu0 0
        %993 = vmatprep.subr.bf16.mxu0 0
        %994 = vmatpush1.bf16.msra.mxu0 0
        %995 = vmatprep.subr.bf16.mxu0 0
        %996 = vmatpush1.bf16.msra.mxu0 0
        %997 = vmatprep.subr.bf16.mxu0 0
        %998 = vmatpush1.bf16.msra.mxu0 0
        %999 = vmatprep.subr.bf16.mxu0 0
        %1000 = vmatpush1.bf16.msra.mxu0 0
        %1001 = vmatprep.subr.bf16.mxu0 0
        %1002 = vmatpush1.bf16.msra.mxu0 0
        %1003 = vmatprep.subr.bf16.mxu0 0
        %1004 = vmatpush1.bf16.msra.mxu0 0
        %1005 = vmatprep.subr.bf16.mxu0 0
        %1006 = vmatpush1.bf16.msra.mxu0 0
        %1007 = vmatprep.subr.bf16.mxu0 0
        %1008 = vmatpush1.bf16.msra.mxu0 0
        %1009 = vmatprep.mubr.bf16.mxu0 0
        %1010 = vmatmul.mubr.bf16.gmra.mrb[0].mxu0 %v975
        %v1011 = vpop.f32.mrb[0].mxu0
        %v1012 = vadd.f32 %v959, %v1011
        %v1013 = vpop.f32.mrb[0].mxu0
        %v1014 = vpop.f32.mrb[0].mxu0
        %v1015 = vpop.f32.mrb[0].mxu0
        %1016 = vdwg.mxu0
        %v1017 = vpack.c.bf16 %v1012, %v1012
        %v1018 = vld [vmem:[#allocation2] sm:$0xf]
        %vm1019 = vcmask 64512
        %v1021 = vsel %vm1019, %v1017, 0
        %v1024 = vsel %vm1019, %v1018, 0
        %1026 = vmatprep.subr.bf16.mxu0 0
        %1027 = vmatpush1.bf16.xpose.msra.mxu0 %v1024
        %1028 = vmatprep.subr.bf16.mxu0 0
        %1029 = vmatpush1.bf16.xpose.msra.mxu0 0
        %1030 = vmatprep.subr.bf16.mxu0 0
        %1031 = vmatpush1.bf16.xpose.msra.mxu0 0
        %1032 = vmatprep.subr.bf16.mxu0 0
        %1033 = vmatpush1.bf16.xpose.msra.mxu0 0
        %1034 = vmatprep.subr.bf16.mxu0 0
        %1035 = vmatpush1.bf16.xpose.msra.mxu0 0
        %1036 = vmatprep.subr.bf16.mxu0 0
        %1037 = vmatpush1.bf16.xpose.msra.mxu0 0
        %1038 = vmatprep.subr.bf16.mxu0 0
        %1039 = vmatpush1.bf16.xpose.msra.mxu0 0
        %1040 = vmatprep.subr.bf16.mxu0 0
        %1041 = vmatpush1.bf16.xpose.msra.mxu0 0
        %1042 = vmatprep.subr.bf16.mxu0 0
        %1043 = vmatpush1.bf16.xpose.msra.mxu0 0
        %1044 = vmatprep.subr.bf16.mxu0 0
        %1045 = vmatpush1.bf16.xpose.msra.mxu0 0
        %1046 = vmatprep.subr.bf16.mxu0 0
        %1047 = vmatpush1.bf16.xpose.msra.mxu0 0
        %1048 = vmatprep.subr.bf16.mxu0 0
        %1049 = vmatpush1.bf16.xpose.msra.mxu0 0
        %1050 = vmatprep.subr.bf16.mxu0 0
        %1051 = vmatpush1.bf16.xpose.msra.mxu0 0
        %1052 = vmatprep.subr.bf16.mxu0 0
        %1053 = vmatpush1.bf16.xpose.msra.mxu0 0
        %1054 = vmatprep.subr.bf16.mxu0 0
        %1055 = vmatpush1.bf16.xpose.msra.mxu0 0
        %1056 = vmatprep.subr.bf16.mxu0 0
        %1057 = vmatpush1.bf16.xpose.msra.mxu0 0
        %1058 = vmatprep.mubr.bf16.mxu0 0
        %1059 = vmatmul.mubr.bf16.gmra.mrb[0].mxu0 %v1021
        %v1060 = vpop.f32.mrb[0].mxu0
        %v1061 = vadd.f32 0.0, %v1060
        %v1062 = vpop.f32.mrb[0].mxu0
        %v1063 = vpop.f32.mrb[0].mxu0
        %v1064 = vpop.f32.mrb[0].mxu0
        %1065 = vdwg.mxu0
        %v1066 = vsel %vm1019, %v1061, -inf
        %1067 = vmax.xlane.f32.xlu0 %v1066
        %v1068 = vpop.xlane.xlu0 %1067
        %v1069 = vsub.f32 %v1061, %v1068
        %v1070 = vmul.f32 %v1069, 1.442695
        %v1071 = vpow.pop %v1070
        %v1072 = vsel %vm1019, %v1071, 0.0
        %1073 = vadd.xlane.f32.xlu0 %v1072
        %v1074 = vpop.xlane.xlu0 %1073
        %v1075 = vrcp.pop %v1074
        %v1076 = vmul.f32 %v1071, %v1075
        %v1077 = vpack.c.bf16 %v1076, %v1076
        %v1078 = vld [vmem:[#allocation3] sm:$0xf]
        %v1080 = vsel %vm1019, %v1077, 0
        %vm1082 = vcmask 1043456
        %v1084 = vsel %vm1082, %v1078, 0
        %1086 = vmatprep.subr.bf16.mxu0 0
        %1087 = vmatpush1.bf16.msra.mxu0 %v1084
        %1088 = vmatprep.subr.bf16.mxu0 0
        %1089 = vmatpush1.bf16.msra.mxu0 0
        %1090 = vmatprep.subr.bf16.mxu0 0
        %1091 = vmatpush1.bf16.msra.mxu0 0
        %1092 = vmatprep.subr.bf16.mxu0 0
        %1093 = vmatpush1.bf16.msra.mxu0 0
        %1094 = vmatprep.subr.bf16.mxu0 0
        %1095 = vmatpush1.bf16.msra.mxu0 0
        %1096 = vmatprep.subr.bf16.mxu0 0
        %1097 = vmatpush1.bf16.msra.mxu0 0
        %1098 = vmatprep.subr.bf16.mxu0 0
        %1099 = vmatpush1.bf16.msra.mxu0 0
        %1100 = vmatprep.subr.bf16.mxu0 0
        %1101 = vmatpush1.bf16.msra.mxu0 0
        %1102 = vmatprep.subr.bf16.mxu0 0
        %1103 = vmatpush1.bf16.msra.mxu0 0
        %1104 = vmatprep.subr.bf16.mxu0 0
        %1105 = vmatpush1.bf16.msra.mxu0 0
        %1106 = vmatprep.subr.bf16.mxu0 0
        %1107 = vmatpush1.bf16.msra.mxu0 0
        %1108 = vmatprep.subr.bf16.mxu0 0
        %1109 = vmatpush1.bf16.msra.mxu0 0
        %1110 = vmatprep.subr.bf16.mxu0 0
        %1111 = vmatpush1.bf16.msra.mxu0 0
        %1112 = vmatprep.subr.bf16.mxu0 0
        %1113 = vmatpush1.bf16.msra.mxu0 0
        %1114 = vmatprep.subr.bf16.mxu0 0
        %1115 = vmatpush1.bf16.msra.mxu0 0
        %1116 = vmatprep.subr.bf16.mxu0 0
        %1117 = vmatpush1.bf16.msra.mxu0 0
        %1118 = vmatprep.mubr.bf16.mxu0 0
        %1119 = vmatmul.mubr.bf16.gmra.mrb[0].mxu0 %v1080
        %v1120 = vpop.f32.mrb[0].mxu0
        %v1121 = vadd.f32 0.0, %v1120
        %v1122 = vpop.f32.mrb[0].mxu0
        %v1123 = vpop.f32.mrb[0].mxu0
        %v1124 = vpop.f32.mrb[0].mxu0
        %1125 = vdwg.mxu0
        %1126 = vst.msk [vmem:[#allocation4] sm:$0xff] %vm1019, %v1121
        %s1127 = scalar_lea.vmem [#allocation2], 4
        %v1128 = vld [vmem:[%s1127] sm:$0xf]
        %1130 = vrot.lane.b32.xlu0 %v1017, 120
        %v1131 = vpop.permute.xlu0 %1130
        %v1133 = vsel %vm1019, %v1131, 0
        %v1136 = vsel %vm1019, %v1128, 0
        %1138 = vmatprep.subr.bf16.mxu0 0
        %1139 = vmatpush1.bf16.xpose.msra.mxu0 %v1136
        %1140 = vmatprep.subr.bf16.mxu0 0
        %1141 = vmatpush1.bf16.xpose.msra.mxu0 0
        %1142 = vmatprep.subr.bf16.mxu0 0
        %1143 = vmatpush1.bf16.xpose.msra.mxu0 0
        %1144 = vmatprep.subr.bf16.mxu0 0
        %1145 = vmatpush1.bf16.xpose.msra.mxu0 0
        %1146 = vmatprep.subr.bf16.mxu0 0
        %1147 = vmatpush1.bf16.xpose.msra.mxu0 0
        %1148 = vmatprep.subr.bf16.mxu0 0
        %1149 = vmatpush1.bf16.xpose.msra.mxu0 0
        %1150 = vmatprep.subr.bf16.mxu0 0
        %1151 = vmatpush1.bf16.xpose.msra.mxu0 0
        %1152 = vmatprep.subr.bf16.mxu0 0
        %1153 = vmatpush1.bf16.xpose.msra.mxu0 0
        %1154 = vmatprep.subr.bf16.mxu0 0
        %1155 = vmatpush1.bf16.xpose.msra.mxu0 0
        %1156 = vmatprep.subr.bf16.mxu0 0
        %1157 = vmatpush1.bf16.xpose.msra.mxu0 0
        %1158 = vmatprep.subr.bf16.mxu0 0
        %1159 = vmatpush1.bf16.xpose.msra.mxu0 0
        %1160 = vmatprep.subr.bf16.mxu0 0
        %1161 = vmatpush1.bf16.xpose.msra.mxu0 0
        %1162 = vmatprep.subr.bf16.mxu0 0
        %1163 = vmatpush1.bf16.xpose.msra.mxu0 0
        %1164 = vmatprep.subr.bf16.mxu0 0
        %1165 = vmatpush1.bf16.xpose.msra.mxu0 0
        %1166 = vmatprep.subr.bf16.mxu0 0
        %1167 = vmatpush1.bf16.xpose.msra.mxu0 0
        %1168 = vmatprep.subr.bf16.mxu0 0
        %1169 = vmatpush1.bf16.xpose.msra.mxu0 0
        %1170 = vmatprep.mubr.bf16.mxu0 0
        %1171 = vmatmul.mubr.bf16.gmra.mrb[0].mxu0 %v1133
        %v1172 = vpop.f32.mrb[0].mxu0
        %v1173 = vadd.f32 0.0, %v1172
        %v1174 = vpop.f32.mrb[0].mxu0
        %v1175 = vpop.f32.mrb[0].mxu0
        %v1176 = vpop.f32.mrb[0].mxu0
        %1177 = vdwg.mxu0
        %v1178 = vsel %vm1019, %v1173, -inf
        %1179 = vmax.xlane.f32.xlu0 %v1178
        %v1180 = vpop.xlane.xlu0 %1179
        %v1181 = vsub.f32 %v1173, %v1180
        %v1182 = vmul.f32 %v1181, 1.442695
        %v1183 = vpow.pop %v1182
        %v1184 = vsel %vm1019, %v1183, 0.0
        %1185 = vadd.xlane.f32.xlu0 %v1184
        %v1186 = vpop.xlane.xlu0 %1185
        %v1187 = vrcp.pop %v1186
        %v1188 = vmul.f32 %v1183, %v1187
        %v1189 = vpack.c.bf16 %v1188, %v1188
        %s1190 = scalar_lea.vmem [#allocation3], 4
        %v1191 = vld [vmem:[%s1190] sm:$0xf]
        %v1193 = vsel %vm1019, %v1189, 0
        %v1196 = vsel %vm1082, %v1191, 0
        %1198 = vmatprep.subr.bf16.mxu0 0
        %1199 = vmatpush1.bf16.msra.mxu0 %v1196
        %1200 = vmatprep.subr.bf16.mxu0 0
        %1201 = vmatpush1.bf16.msra.mxu0 0
        %1202 = vmatprep.subr.bf16.mxu0 0
        %1203 = vmatpush1.bf16.msra.mxu0 0
        %1204 = vmatprep.subr.bf16.mxu0 0
        %1205 = vmatpush1.bf16.msra.mxu0 0
        %1206 = vmatprep.subr.bf16.mxu0 0
        %1207 = vmatpush1.bf16.msra.mxu0 0
        %1208 = vmatprep.subr.bf16.mxu0 0
        %1209 = vmatpush1.bf16.msra.mxu0 0
        %1210 = vmatprep.subr.bf16.mxu0 0
        %1211 = vmatpush1.bf16.msra.mxu0 0
        %1212 = vmatprep.subr.bf16.mxu0 0
        %1213 = vmatpush1.bf16.msra.mxu0 0
        %1214 = vmatprep.subr.bf16.mxu0 0
        %1215 = vmatpush1.bf16.msra.mxu0 0
        %1216 = vmatprep.subr.bf16.mxu0 0
        %1217 = vmatpush1.bf16.msra.mxu0 0
        %1218 = vmatprep.subr.bf16.mxu0 0
        %1219 = vmatpush1.bf16.msra.mxu0 0
        %1220 = vmatprep.subr.bf16.mxu0 0
        %1221 = vmatpush1.bf16.msra.mxu0 0
        %1222 = vmatprep.subr.bf16.mxu0 0
        %1223 = vmatpush1.bf16.msra.mxu0 0
        %1224 = vmatprep.subr.bf16.mxu0 0
        %1225 = vmatpush1.bf16.msra.mxu0 0
        %1226 = vmatprep.subr.bf16.mxu0 0
        %1227 = vmatpush1.bf16.msra.mxu0 0
        %1228 = vmatprep.subr.bf16.mxu0 0
        %1229 = vmatpush1.bf16.msra.mxu0 0
        %1230 = vmatprep.mubr.bf16.mxu0 0
        %1231 = vmatmul.mubr.bf16.gmra.mrb[0].mxu0 %v1193
        %v1232 = vpop.f32.mrb[0].mxu0
        %v1233 = vadd.f32 0.0, %v1232
        %v1234 = vpop.f32.mrb[0].mxu0
        %v1235 = vpop.f32.mrb[0].mxu0
        %v1236 = vpop.f32.mrb[0].mxu0
        %1237 = vdwg.mxu0
        %1239 = vrot.lane.b32.xlu0 %v1233, 8
        %v1240 = vpop.permute.xlu0 %1239
        %vm1242 = vcmask 130112
        %1243 = vst.msk [vmem:[#allocation4] sm:$0xff] %vm1242, %v1240
        %s1244 = scalar_lea.vmem [#allocation2], 8
        %v1245 = vld [vmem:[%s1244] sm:$0xf]
        %1246 = vrot.lane.b32.xlu0 %v1017, 112
        %v1247 = vpop.permute.xlu0 %1246
        %v1249 = vsel %vm1019, %v1247, 0
        %v1252 = vsel %vm1019, %v1245, 0
        %1254 = vmatprep.subr.bf16.mxu0 0
        %1255 = vmatpush1.bf16.xpose.msra.mxu0 %v1252
        %1256 = vmatprep.subr.bf16.mxu0 0
        %1257 = vmatpush1.bf16.xpose.msra.mxu0 0
        %1258 = vmatprep.subr.bf16.mxu0 0
        %1259 = vmatpush1.bf16.xpose.msra.mxu0 0
        %1260 = vmatprep.subr.bf16.mxu0 0
        %1261 = vmatpush1.bf16.xpose.msra.mxu0 0
        %1262 = vmatprep.subr.bf16.mxu0 0
        %1263 = vmatpush1.bf16.xpose.msra.mxu0 0
        %1264 = vmatprep.subr.bf16.mxu0 0
        %1265 = vmatpush1.bf16.xpose.msra.mxu0 0
        %1266 = vmatprep.subr.bf16.mxu0 0
        %1267 = vmatpush1.bf16.xpose.msra.mxu0 0
        %1268 = vmatprep.subr.bf16.mxu0 0
        %1269 = vmatpush1.bf16.xpose.msra.mxu0 0
        %1270 = vmatprep.subr.bf16.mxu0 0
        %1271 = vmatpush1.bf16.xpose.msra.mxu0 0
        %1272 = vmatprep.subr.bf16.mxu0 0
        %1273 = vmatpush1.bf16.xpose.msra.mxu0 0
        %1274 = vmatprep.subr.bf16.mxu0 0
        %1275 = vmatpush1.bf16.xpose.msra.mxu0 0
        %1276 = vmatprep.subr.bf16.mxu0 0
        %1277 = vmatpush1.bf16.xpose.msra.mxu0 0
        %1278 = vmatprep.subr.bf16.mxu0 0
        %1279 = vmatpush1.bf16.xpose.msra.mxu0 0
        %1280 = vmatprep.subr.bf16.mxu0 0
        %1281 = vmatpush1.bf16.xpose.msra.mxu0 0
        %1282 = vmatprep.subr.bf16.mxu0 0
        %1283 = vmatpush1.bf16.xpose.msra.mxu0 0
        %1284 = vmatprep.subr.bf16.mxu0 0
        %1285 = vmatpush1.bf16.xpose.msra.mxu0 0
        %1286 = vmatprep.mubr.bf16.mxu0 0
        %1287 = vmatmul.mubr.bf16.gmra.mrb[0].mxu0 %v1249
        %v1288 = vpop.f32.mrb[0].mxu0
        %v1289 = vadd.f32 0.0, %v1288
        %v1290 = vpop.f32.mrb[0].mxu0
        %v1291 = vpop.f32.mrb[0].mxu0
        %v1292 = vpop.f32.mrb[0].mxu0
        %1293 = vdwg.mxu0
        %v1294 = vsel %vm1019, %v1289, -inf
        %1295 = vmax.xlane.f32.xlu0 %v1294
        %v1296 = vpop.xlane.xlu0 %1295
        %v1297 = vsub.f32 %v1289, %v1296
        %v1298 = vmul.f32 %v1297, 1.442695
        %v1299 = vpow.pop %v1298
        %v1300 = vsel %vm1019, %v1299, 0.0
        %1301 = vadd.xlane.f32.xlu0 %v1300
        %v1302 = vpop.xlane.xlu0 %1301
        %v1303 = vrcp.pop %v1302
        %v1304 = vmul.f32 %v1299, %v1303
        %v1305 = vpack.c.bf16 %v1304, %v1304
        %s1306 = scalar_lea.vmem [#allocation3], 8
        %v1307 = vld [vmem:[%s1306] sm:$0xf]
        %v1309 = vsel %vm1019, %v1305, 0
        %v1312 = vsel %vm1082, %v1307, 0
        %1314 = vmatprep.subr.bf16.mxu0 0
        %1315 = vmatpush1.bf16.msra.mxu0 %v1312
        %1316 = vmatprep.subr.bf16.mxu0 0
        %1317 = vmatpush1.bf16.msra.mxu0 0
        %1318 = vmatprep.subr.bf16.mxu0 0
        %1319 = vmatpush1.bf16.msra.mxu0 0
        %1320 = vmatprep.subr.bf16.mxu0 0
        %1321 = vmatpush1.bf16.msra.mxu0 0
        %1322 = vmatprep.subr.bf16.mxu0 0
        %1323 = vmatpush1.bf16.msra.mxu0 0
        %1324 = vmatprep.subr.bf16.mxu0 0
        %1325 = vmatpush1.bf16.msra.mxu0 0
        %1326 = vmatprep.subr.bf16.mxu0 0
        %1327 = vmatpush1.bf16.msra.mxu0 0
        %1328 = vmatprep.subr.bf16.mxu0 0
        %1329 = vmatpush1.bf16.msra.mxu0 0
        %1330 = vmatprep.subr.bf16.mxu0 0
        %1331 = vmatpush1.bf16.msra.mxu0 0
        %1332 = vmatprep.subr.bf16.mxu0 0
        %1333 = vmatpush1.bf16.msra.mxu0 0
        %1334 = vmatprep.subr.bf16.mxu0 0
        %1335 = vmatpush1.bf16.msra.mxu0 0
        %1336 = vmatprep.subr.bf16.mxu0 0
        %1337 = vmatpush1.bf16.msra.mxu0 0
        %1338 = vmatprep.subr.bf16.mxu0 0
        %1339 = vmatpush1.bf16.msra.mxu0 0
        %1340 = vmatprep.subr.bf16.mxu0 0
        %1341 = vmatpush1.bf16.msra.mxu0 0
        %1342 = vmatprep.subr.bf16.mxu0 0
        %1343 = vmatpush1.bf16.msra.mxu0 0
        %1344 = vmatprep.subr.bf16.mxu0 0
        %1345 = vmatpush1.bf16.msra.mxu0 0
        %1346 = vmatprep.mubr.bf16.mxu0 0
        %1347 = vmatmul.mubr.bf16.gmra.mrb[0].mxu0 %v1309
        %v1348 = vpop.f32.mrb[0].mxu0
        %v1349 = vadd.f32 0.0, %v1348
        %v1350 = vpop.f32.mrb[0].mxu0
        %v1351 = vpop.f32.mrb[0].mxu0
        %v1352 = vpop.f32.mrb[0].mxu0
        %1353 = vdwg.mxu0
        %1355 = vrot.lane.b32.xlu0 %v1349, 16
        %v1356 = vpop.permute.xlu0 %1355
        %vm1358 = vcmask 195712
        %1359 = vst.msk [vmem:[#allocation4] sm:$0xff] %vm1358, %v1356
        %s1360 = scalar_lea.vmem [#allocation2], 12
        %v1361 = vld [vmem:[%s1360] sm:$0xf]
        %1362 = vrot.lane.b32.xlu0 %v1017, 104
        %v1363 = vpop.permute.xlu0 %1362
        %v1365 = vsel %vm1019, %v1363, 0
        %v1368 = vsel %vm1019, %v1361, 0
        %1370 = vmatprep.subr.bf16.mxu0 0
        %1371 = vmatpush1.bf16.xpose.msra.mxu0 %v1368
        %1372 = vmatprep.subr.bf16.mxu0 0
        %1373 = vmatpush1.bf16.xpose.msra.mxu0 0
        %1374 = vmatprep.subr.bf16.mxu0 0
        %1375 = vmatpush1.bf16.xpose.msra.mxu0 0
        %1376 = vmatprep.subr.bf16.mxu0 0
        %1377 = vmatpush1.bf16.xpose.msra.mxu0 0
        %1378 = vmatprep.subr.bf16.mxu0 0
        %1379 = vmatpush1.bf16.xpose.msra.mxu0 0
        %1380 = vmatprep.subr.bf16.mxu0 0
        %1381 = vmatpush1.bf16.xpose.msra.mxu0 0
        %1382 = vmatprep.subr.bf16.mxu0 0
        %1383 = vmatpush1.bf16.xpose.msra.mxu0 0
        %1384 = vmatprep.subr.bf16.mxu0 0
        %1385 = vmatpush1.bf16.xpose.msra.mxu0 0
        %1386 = vmatprep.subr.bf16.mxu0 0
        %1387 = vmatpush1.bf16.xpose.msra.mxu0 0
        %1388 = vmatprep.subr.bf16.mxu0 0
        %1389 = vmatpush1.bf16.xpose.msra.mxu0 0
        %1390 = vmatprep.subr.bf16.mxu0 0
        %1391 = vmatpush1.bf16.xpose.msra.mxu0 0
        %1392 = vmatprep.subr.bf16.mxu0 0
        %1393 = vmatpush1.bf16.xpose.msra.mxu0 0
        %1394 = vmatprep.subr.bf16.mxu0 0
        %1395 = vmatpush1.bf16.xpose.msra.mxu0 0
        %1396 = vmatprep.subr.bf16.mxu0 0
        %1397 = vmatpush1.bf16.xpose.msra.mxu0 0
        %1398 = vmatprep.subr.bf16.mxu0 0
        %1399 = vmatpush1.bf16.xpose.msra.mxu0 0
        %1400 = vmatprep.subr.bf16.mxu0 0
        %1401 = vmatpush1.bf16.xpose.msra.mxu0 0
        %1402 = vmatprep.mubr.bf16.mxu0 0
        %1403 = vmatmul.mubr.bf16.gmra.mrb[0].mxu0 %v1365
        %v1404 = vpop.f32.mrb[0].mxu0
        %v1405 = vadd.f32 0.0, %v1404
        %v1406 = vpop.f32.mrb[0].mxu0
        %v1407 = vpop.f32.mrb[0].mxu0
        %v1408 = vpop.f32.mrb[0].mxu0
        %1409 = vdwg.mxu0
        %v1410 = vsel %vm1019, %v1405, -inf
        %1411 = vmax.xlane.f32.xlu0 %v1410
        %v1412 = vpop.xlane.xlu0 %1411
        %v1413 = vsub.f32 %v1405, %v1412
        %v1414 = vmul.f32 %v1413, 1.442695
        %v1415 = vpow.pop %v1414
        %v1416 = vsel %vm1019, %v1415, 0.0
        %1417 = vadd.xlane.f32.xlu0 %v1416
        %v1418 = vpop.xlane.xlu0 %1417
        %v1419 = vrcp.pop %v1418
        %v1420 = vmul.f32 %v1415, %v1419
        %v1421 = vpack.c.bf16 %v1420, %v1420
        %s1422 = scalar_lea.vmem [#allocation3], 12
        %v1423 = vld [vmem:[%s1422] sm:$0xf]
        %v1425 = vsel %vm1019, %v1421, 0
        %v1428 = vsel %vm1082, %v1423, 0
        %1430 = vmatprep.subr.bf16.mxu0 0
        %1431 = vmatpush1.bf16.msra.mxu0 %v1428
        %1432 = vmatprep.subr.bf16.mxu0 0
        %1433 = vmatpush1.bf16.msra.mxu0 0
        %1434 = vmatprep.subr.bf16.mxu0 0
        %1435 = vmatpush1.bf16.msra.mxu0 0
        %1436 = vmatprep.subr.bf16.mxu0 0
        %1437 = vmatpush1.bf16.msra.mxu0 0
        %1438 = vmatprep.subr.bf16.mxu0 0
        %1439 = vmatpush1.bf16.msra.mxu0 0
        %1440 = vmatprep.subr.bf16.mxu0 0
        %1441 = vmatpush1.bf16.msra.mxu0 0
        %1442 = vmatprep.subr.bf16.mxu0 0
        %1443 = vmatpush1.bf16.msra.mxu0 0
        %1444 = vmatprep.subr.bf16.mxu0 0
        %1445 = vmatpush1.bf16.msra.mxu0 0
        %1446 = vmatprep.subr.bf16.mxu0 0
        %1447 = vmatpush1.bf16.msra.mxu0 0
        %1448 = vmatprep.subr.bf16.mxu0 0
        %1449 = vmatpush1.bf16.msra.mxu0 0
        %1450 = vmatprep.subr.bf16.mxu0 0
        %1451 = vmatpush1.bf16.msra.mxu0 0
        %1452 = vmatprep.subr.bf16.mxu0 0
        %1453 = vmatpush1.bf16.msra.mxu0 0
        %1454 = vmatprep.subr.bf16.mxu0 0
        %1455 = vmatpush1.bf16.msra.mxu0 0
        %1456 = vmatprep.subr.bf16.mxu0 0
        %1457 = vmatpush1.bf16.msra.mxu0 0
        %1458 = vmatprep.subr.bf16.mxu0 0
        %1459 = vmatpush1.bf16.msra.mxu0 0
        %1460 = vmatprep.subr.bf16.mxu0 0
        %1461 = vmatpush1.bf16.msra.mxu0 0
        %1462 = vmatprep.mubr.bf16.mxu0 0
        %1463 = vmatmul.mubr.bf16.gmra.mrb[0].mxu0 %v1425
        %v1464 = vpop.f32.mrb[0].mxu0
        %v1465 = vadd.f32 0.0, %v1464
        %v1466 = vpop.f32.mrb[0].mxu0
        %v1467 = vpop.f32.mrb[0].mxu0
        %v1468 = vpop.f32.mrb[0].mxu0
        %1469 = vdwg.mxu0
        %1471 = vrot.lane.b32.xlu0 %v1465, 24
        %v1472 = vpop.permute.xlu0 %1471
        %vm1474 = vcmask 261312
        %1475 = vst.msk [vmem:[#allocation4] sm:$0xff] %vm1474, %v1472
        %v1476 = vld [vmem:[#allocation4] sm:$0xff]
        %v1477 = vpack.c.bf16 %v1476, %v1476
        %v1478 = vld [vmem:[%s7] sm:$0xf]
        %v1479 = vld [vmem:[%s7 + $0x4] sm:$0xf]
        %v1480 = vld [vmem:[%s7 + $0x8] sm:$0xf]
        %v1481 = vld [vmem:[%s7 + $0xc] sm:$0xf]
        %v1482 = vld [vmem:[%s8] sm:$0x1]
        %v1484 = vlaneseq
        %v1485 = vshrl.u32 %v1484, 7
        %v1486 = vsub.s32 0, %v1485
        %v1487 = vrot.slane %v1482, %v1486
        %v1493 = vunpack.c.l.b16 %v1478
        %v1494 = vunpack.c.l.b16 %v1479
        %v1495 = vunpack.c.l.b16 %v1480
        %v1496 = vunpack.c.l.b16 %v1481
        %v1497 = vpack.c.b16 %v1494, %v1493
        %v1498 = vpack.c.b16 %v1496, %v1495
        %v1502 = vsel %vm973, %v1477, 0
        %1504 = vmatprep.subr.bf16.mxu0 0
        %1505 = vmatpush1.bf16.msra.mxu0 %v1497
        %1506 = vmatprep.subr.bf16.mxu0 0
        %1507 = vmatpush1.bf16.msra.mxu0 %v1498
        %1508 = vmatprep.subr.bf16.mxu0 0
        %1509 = vmatpush1.bf16.msra.mxu0 0
        %1510 = vmatprep.subr.bf16.mxu0 0
        %1511 = vmatpush1.bf16.msra.mxu0 0
        %1512 = vmatprep.subr.bf16.mxu0 0
        %1513 = vmatpush1.bf16.msra.mxu0 0
        %1514 = vmatprep.subr.bf16.mxu0 0
        %1515 = vmatpush1.bf16.msra.mxu0 0
        %1516 = vmatprep.subr.bf16.mxu0 0
        %1517 = vmatpush1.bf16.msra.mxu0 0
        %1518 = vmatprep.subr.bf16.mxu0 0
        %1519 = vmatpush1.bf16.msra.mxu0 0
        %1520 = vmatprep.subr.bf16.mxu0 0
        %1521 = vmatpush1.bf16.msra.mxu0 0
        %1522 = vmatprep.subr.bf16.mxu0 0
        %1523 = vmatpush1.bf16.msra.mxu0 0
        %1524 = vmatprep.subr.bf16.mxu0 0
        %1525 = vmatpush1.bf16.msra.mxu0 0
        %1526 = vmatprep.subr.bf16.mxu0 0
        %1527 = vmatpush1.bf16.msra.mxu0 0
        %1528 = vmatprep.subr.bf16.mxu0 0
        %1529 = vmatpush1.bf16.msra.mxu0 0
        %1530 = vmatprep.subr.bf16.mxu0 0
        %1531 = vmatpush1.bf16.msra.mxu0 0
        %1532 = vmatprep.subr.bf16.mxu0 0
        %1533 = vmatpush1.bf16.msra.mxu0 0
        %1534 = vmatprep.subr.bf16.mxu0 0
        %1535 = vmatpush1.bf16.msra.mxu0 0
        %1536 = vmatprep.mubr.bf16.mxu0 0
        %1537 = vmatmul.mubr.bf16.gmra.mrb[0].mxu0 %v1502
        %v1538 = vpop.f32.mrb[0].mxu0
        %v1539 = vadd.f32 %v1487, %v1538
        %v1540 = vpop.f32.mrb[0].mxu0
        %v1541 = vpop.f32.mrb[0].mxu0
        %v1542 = vpop.f32.mrb[0].mxu0
        %1543 = vdwg.mxu0
        %v1544 = vadd.f32 %v948, %v1539
        %v1545 = vsel %vm973, %v1544, 0.0
        %1546 = vadd.xlane.f32.xlu0 %v1545
        %v1547 = vpop.xlane.xlu0 %1546
        %v1548 = vrcp.pop 32.0
        %v1549 = vmul.f32 %v1547, %v1548
        %v1550 = vsub.f32 %v1544, %v1549
        %v1551 = vmul.f32 %v1550, %v1550
        %v1552 = vsel %vm973, %v1551, 0.0
        %1553 = vadd.xlane.f32.xlu0 %v1552
        %v1554 = vpop.xlane.xlu0 %1553
        %v1555 = vmul.f32 %v1554, %v1548
        %v1556 = vadd.f32 %v1555, 1e-05
        %v1557 = vrsqrt.pop %v1556
        %v1558 = vmul.f32 %v1550, %v1557
        %v1559 = vld [vmem:[%s9] sm:$0x1]
        %v1561 = vlaneseq
        %v1562 = vshrl.u32 %v1561, 7
        %v1563 = vsub.s32 0, %v1562
        %v1564 = vrot.slane %v1559, %v1563
        %v1566 = vmul.f32 %v1558, %v1564
        %v1567 = vld [vmem:[%s10] sm:$0x1]
        %v1569 = vlaneseq
        %v1570 = vshrl.u32 %v1569, 7
        %v1571 = vsub.s32 0, %v1570
        %v1572 = vrot.slane %v1567, %v1571
        %v1574 = vadd.f32 %v1566, %v1572
        %v1575 = vpack.c.bf16 %v1574, %v1574
        %vm1576 = vcmask 257024
        %1577 = vst.msk [vmem:[%s391] sm:$0xf] %vm1576, %v1575
        %s1578 = sand.u32 %s283, 1
        %s1579 = scalar_lea.sflag [#allocation6], %s1578
        %s1580 = sand.u32 %s283, 1
        %s1581 = smul.addr %s1580, 4
        %s1582 = scalar_lea.vmem [#allocation5], %s1581
        // Predicated region
        $region69: #{tpu_custom_call.1} parent=63 // pred_check
          %p1583 = pneg %p293
        $region70: #{tpu_custom_call.1} parent=63 // pred_check_branch
          %1585 = sbr.rel (%p1583) target = $region72
        $region71: #{tpu_custom_call.1} parent=63 // pred_region
          %s1587 = ssub.s32 64, 64
          %1588 = vsyncadd %s1579, %s1587
          %s1589 = sadd.s32 %s30, %s29
          %s1590 = smul.addr %s1589, 64
          %s1591 = scalar_lea.hbm %s11, %s1590
          %s1593 = sshll.u32 %s1582, 4
          %s1594 = int_to_ptr.vmem [resolvable:$true] %s1593
          %1596 = dma.vmem_to_hbm [thread:$0]  %s1594, 64, %s1591, %s1579
        $region72: #{tpu_custom_call.1} parent=63 // pred_fallthru
          _
      $region64: #{tpu_custom_call.1} parent=5 // pred_fallthru
        _
      %p1597 = scmp.le.s32.totalorder 2, %s20
      // Predicated region
      $region73: #{tpu_custom_call.1} parent=5 // pred_check
        %p1598 = pneg %p1597
      $region74: #{tpu_custom_call.1} parent=5 // pred_check_branch
        %1600 = sbr.rel (%p1598) target = $region76
      $region75: #{tpu_custom_call.1} parent=5 // pred_region
        %s1601 = ssub.s32 %s20, 2
        // Predicated region
        $region77: #{tpu_custom_call.1} parent=75 // pred_check
          %p1602 = pneg %p299
        $region78: #{tpu_custom_call.1} parent=75 // pred_check_branch
          %1604 = sbr.rel (%p1602) target = $region80
        $region79: #{tpu_custom_call.1} parent=75 // pred_region
          %s1605 = sand.u32 %s284, 1
          %s1606 = scalar_lea.sflag [#allocation6], %s1605
          %s1607 = sand.u32 %s284, 1
          %s1608 = smul.addr %s1607, 4
          %s1609 = scalar_lea.vmem [#allocation5], %s1608
          %1610 = dma.done %s1606, 64
        $region80: #{tpu_custom_call.1} parent=75 // pred_fallthru
          _
      $region76: #{tpu_custom_call.1} parent=5 // pred_fallthru
        _
    $region6: #{tpu_custom_call.1} parent=1 // loop_footer
      %s24 = sadd.s32 1, %s20
    $region7: #{tpu_custom_call.1} parent=1 // loop_footer_branch
      %19 = sbr.rel target = $region3
    $region8: #{tpu_custom_call.1} parent=1 // loop_exit
      _
    %1611 = vsyncpa [#allocation6], 1
    %s1612 = scalar_lea.sflag [#allocation6], 1
    %1613 = vsyncpa %s1612, 1

</llo_original>
